<compile_context>
chip_gen: v5e
topology: v5e:2x2
jax: 0.10.0
libtpu: 0.0.40
codegen_flags: <defaults>
</compile_context>

<pallas_src>
import jax
import jax.numpy as jnp
from jax.experimental import pallas as pl
from jax.experimental.pallas import tpu as pltpu


_EPS = 1e-12  # F.normalize default eps


def _make_cosface_kernel(s, m, tc, num_classes, needs_mask, compute_dtype,
                         mm_precision):
    s = float(s)
    sm = float(s) * float(m)

    def kernel(feat_ref, w_ref, label_ref, cos_ref, m_ref, l_ref, t_ref,
               fnorm_ref):
        split = pl.program_id(0)
        j = pl.program_id(2)
        ncps = pl.num_programs(2)

        @pl.when(j == 0)
        def _init():
            f = feat_ref[...].astype(jnp.float32)
            inv = jax.lax.rsqrt(
                jnp.maximum(jnp.sum(f * f, axis=-1, keepdims=True),
                            _EPS * _EPS))
            fnorm_ref[...] = (f * inv).astype(fnorm_ref.dtype)
            m_ref[...] = jnp.full(m_ref.shape, -jnp.inf, dtype=m_ref.dtype)
            l_ref[...] = jnp.zeros(l_ref.shape, dtype=l_ref.dtype)
            t_ref[...] = jnp.zeros(t_ref.shape, dtype=t_ref.dtype)

        # Normalize this (tc, F) weight tile (rsqrt stays on the EUP slot).
        w = w_ref[...].astype(jnp.float32)
        w_inv = jax.lax.rsqrt(
            jnp.maximum(jnp.sum(w * w, axis=-1, keepdims=True), _EPS * _EPS))
        w_n = (w * w_inv).astype(compute_dtype)

        # cosine tile = f_n @ w_n.T, contracting over F without a transpose.
        cosine = jax.lax.dot_general(
            fnorm_ref[...], w_n,
            dimension_numbers=(((1,), (1,)), ((), ())),
            preferred_element_type=jnp.float32,
            precision=mm_precision)
        cos_ref[...] = cosine.astype(cos_ref.dtype)

        # Folded CosFace margin: logits = s*cosine - (s*m) at the label column.
        col_start = (split * ncps + j) * tc
        col = jax.lax.broadcasted_iota(jnp.int32, cosine.shape, 1)  # local cols
        # NOTE: out-of-range labels give a finite-but-wrong loss silently
        # (PyTorch CrossEntropyLoss would raise).
        is_tgt = col == (label_ref[...] - col_start)                # (tb, tc)
        logits = s * cosine - sm * is_tgt.astype(jnp.float32)

        if needs_mask:
            # Ragged last class tile: columns beyond num_classes do not exist.
            logits = jnp.where(col < (num_classes - col_start), logits,
                               -jnp.inf)

        # Target logit (nonzero only in the tile holding the label column).
        t_ref[...] += jnp.sum(jnp.where(is_tgt, logits, 0.0),
                              axis=-1, keepdims=True)

        # Online log-sum-exp over the class tiles owned by this split.
        tile_max = jnp.max(logits, axis=-1, keepdims=True)
        m_new = jnp.maximum(m_ref[...], tile_max)
        l_ref[...] = (l_ref[...] * jnp.exp(m_ref[...] - m_new) +
                      jnp.sum(jnp.exp(logits - m_new), axis=-1, keepdims=True))
        m_ref[...] = m_new

    return kernel


def _vmem_capacity_bytes() -> int:
    try:
        cap = int(pltpu.get_tpu_info().vmem_capacity_bytes)
        if cap > 0:
            return cap
    except Exception:
        pass
    return 64 * 1024 * 1024   # conservative: v7x per-core VMEM


def _vmem_cost_bytes(tb, tc, f):
    w_stream = 2 * tc * f * 4      # double-buffered streamed weight tile
    w_tmp = tc * f * 4             # normalized-weight temporary
    cos_out = 2 * tb * tc * 4      # double-buffered cosine output tile
    tile_tmp = 3 * tb * tc * 4     # cosine / logits / exp temporaries
    feat = 3 * tb * f * 4          # feature (double-buffered) + fnorm scratch
    return w_stream + w_tmp + cos_out + tile_tmp + feat


def _choose_class_tile(num_classes, feat_dim, tb, budget):
    if num_classes <= 128:
        return num_classes
    c_pad = -(-num_classes // 128) * 128
    start = min(4096, c_pad)
    tc = 128
    for t in range(start, 127, -128):           # largest tile fitting budget
        if _vmem_cost_bytes(tb, t, feat_dim) <= budget:
            tc = t
            break
    # Prefer an even class-tile count so the class range can be split across
    # the two TensorCores of a v7x megacore (harmless on 1-TC chips).
    def n_tiles(t):
        return -(-num_classes // t)
    if n_tiles(tc) % 2 == 1:
        for t in range(tc, 127, -128):
            if n_tiles(t) % 2 == 0:
                tc = t
                break
    return tc


def cosface_loss(feature, weight, label, s=30.0, m=0.4,
                 matmul_dtype="bfloat16", class_tile=None):
    """Pallas CosFace forward.  Returns (mean_loss, cosine) like the module.

    matmul_dtype: "bfloat16" (single-pass MXU, ~1e-3 cosine error, fastest) or
                  "float32"  (Precision.HIGHEST multi-pass, bit-accurate).
    """
    B, F = feature.shape
    C, F2 = weight.shape
    assert F == F2, "feature dim mismatch"
    label2d = label.astype(jnp.int32).reshape(B, 1)

    vmem_cap = _vmem_capacity_bytes()
    budget = int(vmem_cap * 0.55)

    # One batch tile: the weight stream dominates HBM traffic, so keep the
    # whole (small re-id) batch resident and stream the weight exactly once.
    tb = B
    n_bt = 1
    tc = int(class_tile) if class_tile is not None else \
        _choose_class_tile(C, F, tb, budget)
    n_ct = -(-C // tc)                  # number of class tiles (ceil)
    ns = 2 if n_ct % 2 == 0 else 1      # class-range split across TensorCores
    ncps = n_ct // ns                   # class tiles per split
    needs_mask = (n_ct * tc != C)       # ragged last class tile

    compute_dtype = (jnp.bfloat16 if matmul_dtype == "bfloat16"
                     else jnp.float32)
    mm_precision = (None if compute_dtype == jnp.bfloat16
                    else jax.lax.Precision.HIGHEST)

    kernel = _make_cosface_kernel(s, m, tc, C, needs_mask, compute_dtype,
                                  mm_precision)

    grid = (ns, n_bt, ncps)

    cosine, m_part, l_part, t_part = pl.pallas_call(
        kernel,
        out_shape=(
            jax.ShapeDtypeStruct((B, C), jnp.float32),       # cosine matrix
            jax.ShapeDtypeStruct((ns * B, 1), jnp.float32),  # partial max
            jax.ShapeDtypeStruct((ns * B, 1), jnp.float32),  # partial sum
            jax.ShapeDtypeStruct((ns * B, 1), jnp.float32),  # target logit
        ),
        grid=grid,
        in_specs=[
            pl.BlockSpec((tb, F), lambda sp, i, j: (i, 0)),            # feature
            pl.BlockSpec((tc, F), lambda sp, i, j: (sp * ncps + j, 0)),  # weight
            pl.BlockSpec((tb, 1), lambda sp, i, j: (i, 0)),            # labels
        ],
        out_specs=(
            pl.BlockSpec((tb, tc), lambda sp, i, j: (i, sp * ncps + j)),
            pl.BlockSpec((tb, 1), lambda sp, i, j: (sp * n_bt + i, 0)),
            pl.BlockSpec((tb, 1), lambda sp, i, j: (sp * n_bt + i, 0)),
            pl.BlockSpec((tb, 1), lambda sp, i, j: (sp * n_bt + i, 0)),
        ),
        scratch_shapes=[
            pltpu.VMEM((tb, F), compute_dtype),   # normalized feature cache
        ],
        compiler_params=pltpu.CompilerParams(
            dimension_semantics=("parallel", "parallel", "arbitrary"),
            vmem_limit_bytes=int(min(vmem_cap * 0.8, 128 * 1024 * 1024)),
        ),
    )(feature, weight, label2d)

    # Combine the per-split partial log-sum-exps (tiny (ns, B) math).
    m_p = m_part.reshape(ns, B)
    l_p = l_part.reshape(ns, B)
    t_p = t_part.reshape(ns, B)
    m_max = jnp.max(m_p, axis=0)
    lse = m_max + jnp.log(jnp.sum(l_p * jnp.exp(m_p - m_max), axis=0))
    row_loss = lse - jnp.sum(t_p, axis=0)
    loss = jnp.mean(row_loss)       # nn.CrossEntropyLoss default 'mean'
    return loss, cosine


def _reference(feature, weight, label, s=30.0, m=0.4):
    eps = 1e-12
    f_n = feature / jnp.maximum(
        jnp.linalg.norm(feature, axis=-1, keepdims=True), eps)
    w_n = weight / jnp.maximum(
        jnp.linalg.norm(weight, axis=-1, keepdims=True), eps)
    cosine = jnp.einsum("bf,cf->bc", f_n, w_n,
                        precision=jax.lax.Precision.HIGHEST)
    one_hot = jax.nn.one_hot(label, weight.shape[0], dtype=cosine.dtype)
    logits = (cosine - m * one_hot) * s
    logp = jax.nn.log_softmax(logits, axis=-1)
    loss = -jnp.mean(jnp.sum(logp * one_hot, axis=-1))
    return loss, cosine


if __name__ == "__main__":
    # Small shapes consistent with the module: feature_size=128, num_classes=256.
    B, FEAT, NUM_CLASSES = 8, 128, 256
    s_scale, margin = 30.0, 0.4

    key = jax.random.PRNGKey(0)
    k_feat, k_w, k_lbl = jax.random.split(key, 3)

    feature = jax.random.normal(k_feat, (B, FEAT), dtype=jnp.float32)
    # nn.init.xavier_uniform_ on weight of shape (num_classes, feature_size).
    bound = (6.0 / (NUM_CLASSES + FEAT)) ** 0.5
    weight = jax.random.uniform(k_w, (NUM_CLASSES, FEAT), minval=-bound,
                                maxval=bound, dtype=jnp.float32)
    label = jax.random.randint(k_lbl, (B,), 0, NUM_CLASSES, dtype=jnp.int32)

    ref_loss, ref_cos = _reference(feature, weight, label, s_scale, margin)

    # 1) Bit-accurate path, single class tile (degenerate online LSE).
    loss1, cos1 = cosface_loss(feature, weight, label, s_scale, margin,
                               matmul_dtype="float32", class_tile=256)
    loss1 = jax.block_until_ready(loss1)
    cos1 = jax.block_until_ready(cos1)
    assert jnp.allclose(cos1, ref_cos, atol=1e-4, rtol=1e-4), "cosine mismatch (fp32)"
    assert jnp.allclose(loss1, ref_loss, atol=1e-4, rtol=1e-4), "loss mismatch (fp32)"

    # 2) Default fast bf16 path with streamed weight tiles + 2-way class split
    #    (partial-LSE combine in the wrapper).
    loss2, cos2 = cosface_loss(feature, weight, label, s_scale, margin)
    loss2 = jax.block_until_ready(loss2)
    cos2 = jax.block_until_ready(cos2)
    assert jnp.allclose(cos2, ref_cos, atol=3e-3, rtol=0.0), "cosine mismatch (bf16)"
    assert jnp.abs(loss2 - ref_loss) < 5e-2, "loss mismatch (bf16)"

    # 3) Ragged class count (C not a multiple of the class tile) exercises the
    #    -inf column masking; bit-accurate path.
    C3 = 200
    weight3 = weight[:C3]
    label3 = label % C3
    ref_loss3, ref_cos3 = _reference(feature, weight3, label3, s_scale, margin)
    loss3, cos3 = cosface_loss(feature, weight3, label3, s_scale, margin,
                               matmul_dtype="float32", class_tile=128)
    loss3 = jax.block_until_ready(loss3)
    cos3 = jax.block_until_ready(cos3)
    assert jnp.allclose(cos3, ref_cos3, atol=1e-4, rtol=1e-4), "cosine mismatch (ragged)"
    assert jnp.allclose(loss3, ref_loss3, atol=1e-4, rtol=1e-4), "loss mismatch (ragged)"

    print("KERNEL_OK")
</pallas_src>

<mosaic_0001>
module attributes {stable_mosaic.version = 11 : i64} {
  func.func @kernel(%arg0: i32, %arg1: i32, %arg2: i32, %arg3: memref<8x128xf32, #tpu.memory_space<vmem>>, %arg4: memref<256x128xf32, #tpu.memory_space<vmem>>, %arg5: memref<8x1xi32, #tpu.memory_space<vmem>>, %arg6: memref<8x256xf32, #tpu.memory_space<vmem>>, %arg7: memref<8x1xf32, #tpu.memory_space<vmem>>, %arg8: memref<8x1xf32, #tpu.memory_space<vmem>>, %arg9: memref<8x1xf32, #tpu.memory_space<vmem>>, %arg10: memref<8x128xf32, #tpu.memory_space<vmem>>) attributes {dimension_semantics = [#tpu.dimension_semantics<parallel>, #tpu.dimension_semantics<parallel>, #tpu.dimension_semantics<arbitrary>], iteration_bounds = array<i64: 1, 1, 1>, scalar_prefetch = 0 : i64, scratch_operands = 1 : i64, tpu.core_type = #tpu.core_type<tc>, window_params = [{transform_indices = @transform_0, window_bounds = array<i64: 8, 128>}, {transform_indices = @transform_1, window_bounds = array<i64: 256, 128>}, {transform_indices = @transform_2, window_bounds = array<i64: 8, 1>}, {transform_indices = @transform_3, window_bounds = array<i64: 8, 256>}, {transform_indices = @transform_4, window_bounds = array<i64: 8, 1>}, {transform_indices = @transform_5, window_bounds = array<i64: 8, 1>}, {transform_indices = @transform_6, window_bounds = array<i64: 8, 1>}]} {
    %c0_i32 = arith.constant 0 : i32
    %0 = arith.cmpi eq, %arg2, %c0_i32 : i32
    %1 = arith.extui %0 : i1 to i32
    %c0_i32_0 = arith.constant 0 : i32
    %2 = arith.cmpi ne, %1, %c0_i32_0 : i32
    scf.if %2 {
      %c0_30 = arith.constant 0 : index
      %c0_31 = arith.constant 0 : index
      %55 = vector.load %arg3[%c0_30, %c0_31] : memref<8x128xf32, #tpu.memory_space<vmem>>, vector<8x128xf32>
      %56 = arith.mulf %55, %55 : vector<8x128xf32>
      %cst_32 = arith.constant dense<0.000000e+00> : vector<8xf32>
      %57 = vector.multi_reduction <add>, %56, %cst_32 [1] : vector<8x128xf32> to vector<8xf32>
      %58 = vector.shape_cast %57 : vector<8xf32> to vector<8x1xf32>
      %cst_33 = arith.constant 1.000000e-24 : f32
      %59 = vector.broadcast %cst_33 : f32 to vector<8x1xf32>
      %60 = arith.maximumf %58, %59 : vector<8x1xf32>
      %61 = math.rsqrt %60 : vector<8x1xf32>
      %62 = vector.broadcast %61 : vector<8x1xf32> to vector<8x128xf32>
      %63 = arith.mulf %55, %62 : vector<8x128xf32>
      %c0_34 = arith.constant 0 : index
      %c0_35 = arith.constant 0 : index
      %64 = vector.load %arg10[%c0_34, %c0_35] : memref<8x128xf32, #tpu.memory_space<vmem>>, vector<8x128xf32>
      tpu.vector_store %arg10[%c0_34, %c0_35], %63 {strides = array<i32>} : memref<8x128xf32, #tpu.memory_space<vmem>>, vector<8x128xf32>,
      %cst_36 = arith.constant 0xFF800000 : f32
      %65 = vector.broadcast %cst_36 : f32 to vector<8x1xf32>
      %c0_37 = arith.constant 0 : index
      %c0_38 = arith.constant 0 : index
      %66 = vector.load %arg7[%c0_37, %c0_38] : memref<8x1xf32, #tpu.memory_space<vmem>>, vector<8x1xf32>
      tpu.vector_store %arg7[%c0_37, %c0_38], %65 {strides = array<i32>} : memref<8x1xf32, #tpu.memory_space<vmem>>, vector<8x1xf32>,
      %cst_39 = arith.constant 0.000000e+00 : f32
      %67 = vector.broadcast %cst_39 : f32 to vector<8x1xf32>
      %c0_40 = arith.constant 0 : index
      %c0_41 = arith.constant 0 : index
      %68 = vector.load %arg8[%c0_40, %c0_41] : memref<8x1xf32, #tpu.memory_space<vmem>>, vector<8x1xf32>
      tpu.vector_store %arg8[%c0_40, %c0_41], %67 {strides = array<i32>} : memref<8x1xf32, #tpu.memory_space<vmem>>, vector<8x1xf32>,
      %cst_42 = arith.constant 0.000000e+00 : f32
      %69 = vector.broadcast %cst_42 : f32 to vector<8x1xf32>
      %c0_43 = arith.constant 0 : index
      %c0_44 = arith.constant 0 : index
      %70 = vector.load %arg9[%c0_43, %c0_44] : memref<8x1xf32, #tpu.memory_space<vmem>>, vector<8x1xf32>
      tpu.vector_store %arg9[%c0_43, %c0_44], %69 {strides = array<i32>} : memref<8x1xf32, #tpu.memory_space<vmem>>, vector<8x1xf32>,
    } else {
    }
    %c0 = arith.constant 0 : index
    %c0_1 = arith.constant 0 : index
    %3 = vector.load %arg4[%c0, %c0_1] : memref<256x128xf32, #tpu.memory_space<vmem>>, vector<256x128xf32>
    %4 = arith.mulf %3, %3 : vector<256x128xf32>
    %cst = arith.constant dense<0.000000e+00> : vector<256xf32>
    %5 = vector.multi_reduction <add>, %4, %cst [1] : vector<256x128xf32> to vector<256xf32>
    %6 = vector.shape_cast %5 : vector<256xf32> to vector<256x1xf32>
    %cst_2 = arith.constant 1.000000e-24 : f32
    %7 = vector.broadcast %cst_2 : f32 to vector<256x1xf32>
    %8 = arith.maximumf %6, %7 : vector<256x1xf32>
    %9 = math.rsqrt %8 : vector<256x1xf32>
    %10 = vector.broadcast %9 : vector<256x1xf32> to vector<256x128xf32>
    %11 = arith.mulf %3, %10 : vector<256x128xf32>
    %c0_3 = arith.constant 0 : index
    %c0_4 = arith.constant 0 : index
    %12 = vector.load %arg10[%c0_3, %c0_4] : memref<8x128xf32, #tpu.memory_space<vmem>>, vector<8x128xf32>
    %cst_5 = arith.constant dense<0.000000e+00> : vector<8x256xf32>
    %13 = tpu.matmul %12, %11, %cst_5 {dimension_numbers = #tpu.dot_dimension_numbers<[1], [1], [0], [0], [0, 0, 1, 0], [], []>, precision = #tpu.contract_precision<fp32>} : vector<8x128xf32>, vector<256x128xf32>, vector<8x256xf32> -> vector<8x256xf32>
    %c0_6 = arith.constant 0 : index
    %c0_7 = arith.constant 0 : index
    %14 = vector.load %arg6[%c0_6, %c0_7] : memref<8x256xf32, #tpu.memory_space<vmem>>, vector<8x256xf32>
    tpu.vector_store %arg6[%c0_6, %c0_7], %13 {strides = array<i32>} : memref<8x256xf32, #tpu.memory_space<vmem>>, vector<8x256xf32>,
    %c1_i32 = arith.constant 1 : i32
    %15 = arith.muli %arg0, %c1_i32 : i32
    %16 = arith.addi %15, %arg2 : i32
    %c256_i32 = arith.constant 256 : i32
    %17 = arith.muli %16, %c256_i32 : i32
    %18 = tpu.iota {dimensions = array<i32: 1>} : vector<8x256xi32>
    %c0_8 = arith.constant 0 : index
    %c0_9 = arith.constant 0 : index
    %19 = vector.load %arg5[%c0_8, %c0_9] : memref<8x1xi32, #tpu.memory_space<vmem>>, vector<8x1xi32>
    %20 = vector.broadcast %17 : i32 to vector<8x1xi32>
    %21 = arith.subi %19, %20 : vector<8x1xi32>
    %22 = vector.broadcast %21 : vector<8x1xi32> to vector<8x256xi32>
    %23 = arith.cmpi eq, %18, %22 : vector<8x256xi32>
    %cst_10 = arith.constant 3.000000e+01 : f32
    %24 = vector.broadcast %cst_10 : f32 to vector<8x256xf32>
    %25 = arith.mulf %24, %13 : vector<8x256xf32>
    %26 = arith.extui %23 : vector<8x256xi1> to vector<8x256xi32>
    %27 = arith.sitofp %26 : vector<8x256xi32> to vector<8x256xf32>
    %cst_11 = arith.constant 1.200000e+01 : f32
    %28 = vector.broadcast %cst_11 : f32 to vector<8x256xf32>
    %29 = arith.mulf %28, %27 : vector<8x256xf32>
    %30 = arith.subf %25, %29 : vector<8x256xf32>
    %c0_12 = arith.constant 0 : index
    %c0_13 = arith.constant 0 : index
    %31 = vector.load %arg9[%c0_12, %c0_13] : memref<8x1xf32, #tpu.memory_space<vmem>>, vector<8x1xf32>
    %cst_14 = arith.constant 0.000000e+00 : f32
    %32 = vector.broadcast %cst_14 : f32 to vector<8x256xf32>
    %33 = arith.select %23, %30, %32 : vector<8x256xi1>, vector<8x256xf32>
    %cst_15 = arith.constant dense<0.000000e+00> : vector<8xf32>
    %34 = vector.multi_reduction <add>, %33, %cst_15 [1] : vector<8x256xf32> to vector<8xf32>
    %35 = vector.shape_cast %34 : vector<8xf32> to vector<8x1xf32>
    %36 = arith.addf %31, %35 : vector<8x1xf32>
    %c0_16 = arith.constant 0 : index
    %c0_17 = arith.constant 0 : index
    %37 = vector.load %arg9[%c0_16, %c0_17] : memref<8x1xf32, #tpu.memory_space<vmem>>, vector<8x1xf32>
    tpu.vector_store %arg9[%c0_16, %c0_17], %36 {strides = array<i32>} : memref<8x1xf32, #tpu.memory_space<vmem>>, vector<8x1xf32>,
    %cst_18 = arith.constant dense<0xFF800000> : vector<8xf32>
    %38 = vector.multi_reduction <maximumf>, %30, %cst_18 [1] : vector<8x256xf32> to vector<8xf32>
    %39 = vector.shape_cast %38 : vector<8xf32> to vector<8x1xf32>
    %c0_19 = arith.constant 0 : index
    %c0_20 = arith.constant 0 : index
    %40 = vector.load %arg7[%c0_19, %c0_20] : memref<8x1xf32, #tpu.memory_space<vmem>>, vector<8x1xf32>
    %41 = arith.maximumf %40, %39 : vector<8x1xf32>
    %c0_21 = arith.constant 0 : index
    %c0_22 = arith.constant 0 : index
    %42 = vector.load %arg8[%c0_21, %c0_22] : memref<8x1xf32, #tpu.memory_space<vmem>>, vector<8x1xf32>
    %c0_23 = arith.constant 0 : index
    %c0_24 = arith.constant 0 : index
    %43 = vector.load %arg7[%c0_23, %c0_24] : memref<8x1xf32, #tpu.memory_space<vmem>>, vector<8x1xf32>
    %44 = arith.subf %43, %41 : vector<8x1xf32>
    %45 = math.exp %44 : vector<8x1xf32>
    %46 = arith.mulf %42, %45 : vector<8x1xf32>
    %47 = vector.broadcast %41 : vector<8x1xf32> to vector<8x256xf32>
    %48 = arith.subf %30, %47 : vector<8x256xf32>
    %49 = math.exp %48 : vector<8x256xf32>
    %cst_25 = arith.constant dense<0.000000e+00> : vector<8xf32>
    %50 = vector.multi_reduction <add>, %49, %cst_25 [1] : vector<8x256xf32> to vector<8xf32>
    %51 = vector.shape_cast %50 : vector<8xf32> to vector<8x1xf32>
    %52 = arith.addf %46, %51 : vector<8x1xf32>
    %c0_26 = arith.constant 0 : index
    %c0_27 = arith.constant 0 : index
    %53 = vector.load %arg8[%c0_26, %c0_27] : memref<8x1xf32, #tpu.memory_space<vmem>>, vector<8x1xf32>
    tpu.vector_store %arg8[%c0_26, %c0_27], %52 {strides = array<i32>} : memref<8x1xf32, #tpu.memory_space<vmem>>, vector<8x1xf32>,
    %c0_28 = arith.constant 0 : index
    %c0_29 = arith.constant 0 : index
    %54 = vector.load %arg7[%c0_28, %c0_29] : memref<8x1xf32, #tpu.memory_space<vmem>>, vector<8x1xf32>
    tpu.vector_store %arg7[%c0_28, %c0_29], %41 {strides = array<i32>} : memref<8x1xf32, #tpu.memory_space<vmem>>, vector<8x1xf32>,
    return
  }
  func.func @transform_0(%arg0: i32, %arg1: i32, %arg2: i32) -> (i32, i32) {
    %c0_i32 = arith.constant 0 : i32
    %c0_i32_0 = arith.constant 0 : i32
    return %arg1, %c0_i32 : i32, i32
  }
  func.func @transform_1(%arg0: i32, %arg1: i32, %arg2: i32) -> (i32, i32) {
    %c1_i32 = arith.constant 1 : i32
    %0 = arith.muli %arg0, %c1_i32 : i32
    %1 = arith.addi %0, %arg2 : i32
    %c0_i32 = arith.constant 0 : i32
    %c0_i32_0 = arith.constant 0 : i32
    return %1, %c0_i32 : i32, i32
  }
  func.func @transform_2(%arg0: i32, %arg1: i32, %arg2: i32) -> (i32, i32) {
    %c0_i32 = arith.constant 0 : i32
    %c0_i32_0 = arith.constant 0 : i32
    return %arg1, %c0_i32 : i32, i32
  }
  func.func @transform_3(%arg0: i32, %arg1: i32, %arg2: i32) -> (i32, i32) {
    %c1_i32 = arith.constant 1 : i32
    %0 = arith.muli %arg0, %c1_i32 : i32
    %1 = arith.addi %0, %arg2 : i32
    %c0_i32 = arith.constant 0 : i32
    return %arg1, %1 : i32, i32
  }
  func.func @transform_4(%arg0: i32, %arg1: i32, %arg2: i32) -> (i32, i32) {
    %c1_i32 = arith.constant 1 : i32
    %0 = arith.muli %arg0, %c1_i32 : i32
    %1 = arith.addi %0, %arg1 : i32
    %c0_i32 = arith.constant 0 : i32
    %c0_i32_0 = arith.constant 0 : i32
    return %1, %c0_i32 : i32, i32
  }
  func.func @transform_5(%arg0: i32, %arg1: i32, %arg2: i32) -> (i32, i32) {
    %c1_i32 = arith.constant 1 : i32
    %0 = arith.muli %arg0, %c1_i32 : i32
    %1 = arith.addi %0, %arg1 : i32
    %c0_i32 = arith.constant 0 : i32
    %c0_i32_0 = arith.constant 0 : i32
    return %1, %c0_i32 : i32, i32
  }
  func.func @transform_6(%arg0: i32, %arg1: i32, %arg2: i32) -> (i32, i32) {
    %c1_i32 = arith.constant 1 : i32
    %0 = arith.muli %arg0, %c1_i32 : i32
    %1 = arith.addi %0, %arg1 : i32
    %c0_i32 = arith.constant 0 : i32
    %c0_i32_0 = arith.constant 0 : i32
    return %1, %c0_i32 : i32, i32
  }
}

</mosaic_0001>

<llo_original>
// kernel: tpu_custom_call.1
$region0: #{tpu_custom_call.1}
  #allocation0 [shape = 'u32[]', space=smem, size = 0x4, offset = 0x4, fixed_abs, tag = 'smem constant byte address 0x4 - core index']
  #allocation1 [shape = 'u32[72,128]{1,0:T(1,128)}', space=vmem, size = 0x9000, scoped, tag = 'internal scratch']
  #allocation2 [shape = 'f32[8,128]{1,0:T(8,128)}', space=vmem, size = 0x1000, scoped, tag = 'scratch operand']
  %s0 = inlined_call_operand.vmem [shape: f32[8,128], index: 0, kind: input, shape index: {}]
  %s1 = inlined_call_operand.hbm [shape: f32[256,128], index: 1, kind: input, shape index: {}]
  %s2 = inlined_call_operand.vmem [shape: s32[8,1], index: 2, kind: input, shape index: {}]
  %s3 = inlined_call_operand.hbm [shape: f32[8,256], index: 3, kind: output, shape index: {0}]
  %s4 = inlined_call_operand.vmem [shape: f32[8,1], index: 4, kind: output, shape index: {1}]
  %s5 = inlined_call_operand.vmem [shape: f32[8,1], index: 5, kind: output, shape index: {2}]
  %s6 = inlined_call_operand.vmem [shape: f32[8,1], index: 6, kind: output, shape index: {3}]
  %7 = xla_tuple %s3, %s4, %s5, %s6
  %s8 = sld [smem:[#allocation0]]
  $region54: #{tpu_custom_call.1} parent=0
    _
  %s10 = ssub.s32 1, %s8
  %s11 = scalar_select 0, %s10, %s8
  $region1: #{tpu_custom_call.1} parent=0
    #allocation3 [shape = 'u8[131072]{0}', space=vmem, size = 0x20000, scoped, tag = 'input window, operand 1, single buffered']
    #allocation4 [shape = 's32[1]{0}', space=sflag, size = 0x4, scoped, tag = 'scoped memory for tpu_custom_call.1']
    #allocation5 [shape = 's32[1]{0}', space=sflag, size = 0x4, scoped, tag = 'scoped memory for tpu_custom_call.1']
    #allocation6 [shape = 'u8[8192]{0}', space=vmem, size = 0x2000, scoped, tag = 'output window, operand 0, single buffered']
    %12 = vsyncpa [#allocation4], 0
    %13 = vsyncpa [#allocation5], 0
    // Predicated region
    $region2: #{tpu_custom_call.1} parent=1 // pred_check
      _
    $region3: #{tpu_custom_call.1} parent=1 // pred_check_branch
      %15 = sbr.rel (0) target = $region5
    $region4: #{tpu_custom_call.1} parent=1 // pred_region
      _
    $region5: #{tpu_custom_call.1} parent=1 // pred_fallthru
      _
    // Predicated region
    $region6: #{tpu_custom_call.1} parent=1 // pred_check
      _
    $region7: #{tpu_custom_call.1} parent=1 // pred_check_branch
      %17 = sbr.rel (0) target = $region9
    $region8: #{tpu_custom_call.1} parent=1 // pred_region
      %s18 = sadd.s32 0, 0
      %s19 = smul.u32 32, %s18
      %21 = vsyncadd [#allocation4], 0
      %s22 = smul.addr %s19, 8
      %s23 = scalar_lea.hbm %s1, %s22
      %s24 = sshll.u32 %s23, 4
      %s25 = int_to_ptr.hbm [resolvable:$true] %s24
      %s26 = sshll.u32 [#allocation3], 4
      %s27 = int_to_ptr.vmem [resolvable:$true] %s26
      %32 = dma.hbm_to_vmem [thread:$0]  %s25, 4096, %s27, [#allocation4], 128, 128, 8
    $region9: #{tpu_custom_call.1} parent=1 // pred_fallthru
      _
    // Predicated region
    $region10: #{tpu_custom_call.1} parent=1 // pred_check
      _
    $region11: #{tpu_custom_call.1} parent=1 // pred_check_branch
      %34 = sbr.rel (0) target = $region13
    $region12: #{tpu_custom_call.1} parent=1 // pred_region
      _
    $region13: #{tpu_custom_call.1} parent=1 // pred_fallthru
      _
    // Predicated region
    $region14: #{tpu_custom_call.1} parent=1 // pred_check
      _
    $region15: #{tpu_custom_call.1} parent=1 // pred_check_branch
      %36 = sbr.rel (0) target = $region17
    $region16: #{tpu_custom_call.1} parent=1 // pred_region
      %38 = dma.done [#allocation4], 4096
    $region17: #{tpu_custom_call.1} parent=1 // pred_fallthru
      _
    %s39 = sadd.s32 0, 0
    %p40 = scmp.lt.s32.totalorder %s39, 0
    %s41 = scalar_select %p40, %s39, 0
    %s42 = smul.addr %s41, 8
    %s43 = scalar_lea.vmem %s4, %s42
    %s44 = sadd.s32 0, 0
    %p45 = scmp.lt.s32.totalorder %s44, 0
    %s46 = scalar_select %p45, %s44, 0
    %s47 = smul.addr %s46, 8
    %s48 = scalar_lea.vmem %s5, %s47
    %s49 = sadd.s32 0, 0
    %p50 = scmp.lt.s32.totalorder %s49, 0
    %s51 = scalar_select %p50, %s49, 0
    %s52 = smul.addr %s51, 8
    %s53 = scalar_lea.vmem %s6, %s52
    %s54 = sadd.s32 0, 0
    %s55 = smul.u32 32, %s54
    %s56 = sadd.s32 0, 0
    %s57 = smul.u32 2, %s56
    %s58 = sadd.s32 0, 0
    %p59 = scmp.lt.s32.totalorder %s58, 0
    %s60 = scalar_select %p59, %s58, 0
    %s61 = smul.addr %s60, 8
    %s62 = scalar_lea.vmem %s4, %s61
    %s63 = sadd.s32 0, 0
    %s64 = sadd.s32 0, 0
    %p65 = scmp.lt.s32.totalorder %s64, 0
    %s66 = scalar_select %p65, %s64, 0
    %s67 = smul.addr %s66, 8
    %s68 = scalar_lea.vmem %s5, %s67
    %s69 = sadd.s32 0, 0
    %s70 = sadd.s32 0, 0
    %p71 = scmp.lt.s32.totalorder %s70, 0
    %s72 = scalar_select %p71, %s70, 0
    %s73 = smul.addr %s72, 8
    %s74 = scalar_lea.vmem %s6, %s73
    %s75 = sadd.s32 0, 0
    %p76 = scmp.eq.s32.totalorder 0, 0
    // Predicated region
    $region18: #{tpu_custom_call.1} parent=1 // pred_check
      %p77 = pneg %p76
    $region19: #{tpu_custom_call.1} parent=1 // pred_check_branch
      %79 = sbr.rel (%p77) target = $region21
    $region20: #{tpu_custom_call.1} parent=1 // pred_region
      %v80 = vld [vmem:[%s0] sm:$0xff]
      %v81 = vmul.f32 %v80, %v80
      %82 = vadd.xlane.f32.xlu0 %v81
      %v83 = vpop.xlane.xlu0 %82
      %v84 = vmax.f32 %v83, 1e-24
      %v85 = vrsqrt.pop %v84
      %v86 = vmul.f32 %v85, %v84
      %v87 = vmul.f32 %v86, %v85
      %v88 = vmul.f32 0.5, %v87
      %v89 = vsub.f32 1.5, %v88
      %v90 = vmul.f32 %v85, %v89
      %vm91 = vweird.f32 %v84
      %vm92 = vweird.f32 %v85
      %vm93 = vmor %vm91, %vm92
      %v94 = vsel %vm93, %v85, %v90
      %v95 = vmul.f32 %v80, %v94
      %96 = vst [vmem:[#allocation2] sm:$0xff] %v95
      %vm97 = vcmask 7168
      %98 = vst.msk [vmem:[%s62] sm:$0xff] %vm97, -inf
      %99 = vst.msk [vmem:[%s68] sm:$0xff] %vm97, 0.0
      %100 = vst.msk [vmem:[%s74] sm:$0xff] %vm97, 0.0
    $region21: #{tpu_custom_call.1} parent=1 // pred_fallthru
      _
    %v101 = vld [vmem:[#allocation3] sm:$0xff]
    %v102 = vld [vmem:[#allocation3 + $0x8] sm:$0xff]
    %v103 = vld [vmem:[#allocation3 + $0x10] sm:$0xff]
    %v104 = vld [vmem:[#allocation3 + $0x18] sm:$0xff]
    %v105 = vld [vmem:[#allocation3 + $0x20] sm:$0xff]
    %v106 = vld [vmem:[#allocation3 + $0x28] sm:$0xff]
    %v107 = vld [vmem:[#allocation3 + $0x30] sm:$0xff]
    %v108 = vld [vmem:[#allocation3 + $0x38] sm:$0xff]
    %v109 = vld [vmem:[#allocation3 + $0x40] sm:$0xff]
    %v110 = vld [vmem:[#allocation3 + $0x48] sm:$0xff]
    %v111 = vld [vmem:[#allocation3 + $0x50] sm:$0xff]
    %v112 = vld [vmem:[#allocation3 + $0x58] sm:$0xff]
    %v113 = vld [vmem:[#allocation3 + $0x60] sm:$0xff]
    %v114 = vld [vmem:[#allocation3 + $0x68] sm:$0xff]
    %v115 = vld [vmem:[#allocation3 + $0x70] sm:$0xff]
    %v116 = vld [vmem:[#allocation3 + $0x78] sm:$0xff]
    %v117 = vld [vmem:[#allocation3 + $0x80] sm:$0xff]
    %v118 = vld [vmem:[#allocation3 + $0x88] sm:$0xff]
    %v119 = vld [vmem:[#allocation3 + $0x90] sm:$0xff]
    %v120 = vld [vmem:[#allocation3 + $0x98] sm:$0xff]
    %v121 = vld [vmem:[#allocation3 + $0xa0] sm:$0xff]
    %v122 = vld [vmem:[#allocation3 + $0xa8] sm:$0xff]
    %v123 = vld [vmem:[#allocation3 + $0xb0] sm:$0xff]
    %v124 = vld [vmem:[#allocation3 + $0xb8] sm:$0xff]
    %v125 = vld [vmem:[#allocation3 + $0xc0] sm:$0xff]
    %v126 = vld [vmem:[#allocation3 + $0xc8] sm:$0xff]
    %v127 = vld [vmem:[#allocation3 + $0xd0] sm:$0xff]
    %v128 = vld [vmem:[#allocation3 + $0xd8] sm:$0xff]
    %v129 = vld [vmem:[#allocation3 + $0xe0] sm:$0xff]
    %v130 = vld [vmem:[#allocation3 + $0xe8] sm:$0xff]
    %v131 = vld [vmem:[#allocation3 + $0xf0] sm:$0xff]
    %v132 = vld [vmem:[#allocation3 + $0xf8] sm:$0xff]
    %v133 = vmul.f32 %v101, %v101
    %v134 = vmul.f32 %v102, %v102
    %v135 = vmul.f32 %v103, %v103
    %v136 = vmul.f32 %v104, %v104
    %v137 = vmul.f32 %v105, %v105
    %v138 = vmul.f32 %v106, %v106
    %v139 = vmul.f32 %v107, %v107
    %v140 = vmul.f32 %v108, %v108
    %v141 = vmul.f32 %v109, %v109
    %v142 = vmul.f32 %v110, %v110
    %v143 = vmul.f32 %v111, %v111
    %v144 = vmul.f32 %v112, %v112
    %v145 = vmul.f32 %v113, %v113
    %v146 = vmul.f32 %v114, %v114
    %v147 = vmul.f32 %v115, %v115
    %v148 = vmul.f32 %v116, %v116
    %v149 = vmul.f32 %v117, %v117
    %v150 = vmul.f32 %v118, %v118
    %v151 = vmul.f32 %v119, %v119
    %v152 = vmul.f32 %v120, %v120
    %v153 = vmul.f32 %v121, %v121
    %v154 = vmul.f32 %v122, %v122
    %v155 = vmul.f32 %v123, %v123
    %v156 = vmul.f32 %v124, %v124
    %v157 = vmul.f32 %v125, %v125
    %v158 = vmul.f32 %v126, %v126
    %v159 = vmul.f32 %v127, %v127
    %v160 = vmul.f32 %v128, %v128
    %v161 = vmul.f32 %v129, %v129
    %v162 = vmul.f32 %v130, %v130
    %v163 = vmul.f32 %v131, %v131
    %v164 = vmul.f32 %v132, %v132
    %165 = vadd.xlane.f32.xlu0 %v133
    %v166 = vpop.xlane.xlu0 %165
    %167 = vadd.xlane.f32.xlu0 %v134
    %v168 = vpop.xlane.xlu0 %167
    %169 = vadd.xlane.f32.xlu0 %v135
    %v170 = vpop.xlane.xlu0 %169
    %171 = vadd.xlane.f32.xlu0 %v136
    %v172 = vpop.xlane.xlu0 %171
    %173 = vadd.xlane.f32.xlu0 %v137
    %v174 = vpop.xlane.xlu0 %173
    %175 = vadd.xlane.f32.xlu0 %v138
    %v176 = vpop.xlane.xlu0 %175
    %177 = vadd.xlane.f32.xlu0 %v139
    %v178 = vpop.xlane.xlu0 %177
    %179 = vadd.xlane.f32.xlu0 %v140
    %v180 = vpop.xlane.xlu0 %179
    %181 = vadd.xlane.f32.xlu0 %v141
    %v182 = vpop.xlane.xlu0 %181
    %183 = vadd.xlane.f32.xlu0 %v142
    %v184 = vpop.xlane.xlu0 %183
    %185 = vadd.xlane.f32.xlu0 %v143
    %v186 = vpop.xlane.xlu0 %185
    %187 = vadd.xlane.f32.xlu0 %v144
    %v188 = vpop.xlane.xlu0 %187
    %189 = vadd.xlane.f32.xlu0 %v145
    %v190 = vpop.xlane.xlu0 %189
    %191 = vadd.xlane.f32.xlu0 %v146
    %v192 = vpop.xlane.xlu0 %191
    %193 = vadd.xlane.f32.xlu0 %v147
    %v194 = vpop.xlane.xlu0 %193
    %195 = vadd.xlane.f32.xlu0 %v148
    %v196 = vpop.xlane.xlu0 %195
    %197 = vadd.xlane.f32.xlu0 %v149
    %v198 = vpop.xlane.xlu0 %197
    %199 = vadd.xlane.f32.xlu0 %v150
    %v200 = vpop.xlane.xlu0 %199
    %201 = vadd.xlane.f32.xlu0 %v151
    %v202 = vpop.xlane.xlu0 %201
    %203 = vadd.xlane.f32.xlu0 %v152
    %v204 = vpop.xlane.xlu0 %203
    %205 = vadd.xlane.f32.xlu0 %v153
    %v206 = vpop.xlane.xlu0 %205
    %207 = vadd.xlane.f32.xlu0 %v154
    %v208 = vpop.xlane.xlu0 %207
    %209 = vadd.xlane.f32.xlu0 %v155
    %v210 = vpop.xlane.xlu0 %209
    %211 = vadd.xlane.f32.xlu0 %v156
    %v212 = vpop.xlane.xlu0 %211
    %213 = vadd.xlane.f32.xlu0 %v157
    %v214 = vpop.xlane.xlu0 %213
    %215 = vadd.xlane.f32.xlu0 %v158
    %v216 = vpop.xlane.xlu0 %215
    %217 = vadd.xlane.f32.xlu0 %v159
    %v218 = vpop.xlane.xlu0 %217
    %219 = vadd.xlane.f32.xlu0 %v160
    %v220 = vpop.xlane.xlu0 %219
    %221 = vadd.xlane.f32.xlu0 %v161
    %v222 = vpop.xlane.xlu0 %221
    %223 = vadd.xlane.f32.xlu0 %v162
    %v224 = vpop.xlane.xlu0 %223
    %225 = vadd.xlane.f32.xlu0 %v163
    %v226 = vpop.xlane.xlu0 %225
    %227 = vadd.xlane.f32.xlu0 %v164
    %v228 = vpop.xlane.xlu0 %227
    %v229 = vmax.f32 %v166, 1e-24
    %v230 = vmax.f32 %v168, 1e-24
    %v231 = vmax.f32 %v170, 1e-24
    %v232 = vmax.f32 %v172, 1e-24
    %v233 = vmax.f32 %v174, 1e-24
    %v234 = vmax.f32 %v176, 1e-24
    %v235 = vmax.f32 %v178, 1e-24
    %v236 = vmax.f32 %v180, 1e-24
    %v237 = vmax.f32 %v182, 1e-24
    %v238 = vmax.f32 %v184, 1e-24
    %v239 = vmax.f32 %v186, 1e-24
    %v240 = vmax.f32 %v188, 1e-24
    %v241 = vmax.f32 %v190, 1e-24
    %v242 = vmax.f32 %v192, 1e-24
    %v243 = vmax.f32 %v194, 1e-24
    %v244 = vmax.f32 %v196, 1e-24
    %v245 = vmax.f32 %v198, 1e-24
    %v246 = vmax.f32 %v200, 1e-24
    %v247 = vmax.f32 %v202, 1e-24
    %v248 = vmax.f32 %v204, 1e-24
    %v249 = vmax.f32 %v206, 1e-24
    %v250 = vmax.f32 %v208, 1e-24
    %v251 = vmax.f32 %v210, 1e-24
    %v252 = vmax.f32 %v212, 1e-24
    %v253 = vmax.f32 %v214, 1e-24
    %v254 = vmax.f32 %v216, 1e-24
    %v255 = vmax.f32 %v218, 1e-24
    %v256 = vmax.f32 %v220, 1e-24
    %v257 = vmax.f32 %v222, 1e-24
    %v258 = vmax.f32 %v224, 1e-24
    %v259 = vmax.f32 %v226, 1e-24
    %v260 = vmax.f32 %v228, 1e-24
    %v261 = vrsqrt.pop %v229
    %v262 = vmul.f32 %v261, %v229
    %v263 = vmul.f32 %v262, %v261
    %v264 = vmul.f32 0.5, %v263
    %v265 = vsub.f32 1.5, %v264
    %v266 = vmul.f32 %v261, %v265
    %vm267 = vweird.f32 %v229
    %vm268 = vweird.f32 %v261
    %vm269 = vmor %vm267, %vm268
    %v270 = vsel %vm269, %v261, %v266
    %v271 = vrsqrt.pop %v230
    %v272 = vmul.f32 %v271, %v230
    %v273 = vmul.f32 %v272, %v271
    %v274 = vmul.f32 0.5, %v273
    %v275 = vsub.f32 1.5, %v274
    %v276 = vmul.f32 %v271, %v275
    %vm277 = vweird.f32 %v230
    %vm278 = vweird.f32 %v271
    %vm279 = vmor %vm277, %vm278
    %v280 = vsel %vm279, %v271, %v276
    %v281 = vrsqrt.pop %v231
    %v282 = vmul.f32 %v281, %v231
    %v283 = vmul.f32 %v282, %v281
    %v284 = vmul.f32 0.5, %v283
    %v285 = vsub.f32 1.5, %v284
    %v286 = vmul.f32 %v281, %v285
    %vm287 = vweird.f32 %v231
    %vm288 = vweird.f32 %v281
    %vm289 = vmor %vm287, %vm288
    %v290 = vsel %vm289, %v281, %v286
    %v291 = vrsqrt.pop %v232
    %v292 = vmul.f32 %v291, %v232
    %v293 = vmul.f32 %v292, %v291
    %v294 = vmul.f32 0.5, %v293
    %v295 = vsub.f32 1.5, %v294
    %v296 = vmul.f32 %v291, %v295
    %vm297 = vweird.f32 %v232
    %vm298 = vweird.f32 %v291
    %vm299 = vmor %vm297, %vm298
    %v300 = vsel %vm299, %v291, %v296
    %v301 = vrsqrt.pop %v233
    %v302 = vmul.f32 %v301, %v233
    %v303 = vmul.f32 %v302, %v301
    %v304 = vmul.f32 0.5, %v303
    %v305 = vsub.f32 1.5, %v304
    %v306 = vmul.f32 %v301, %v305
    %vm307 = vweird.f32 %v233
    %vm308 = vweird.f32 %v301
    %vm309 = vmor %vm307, %vm308
    %v310 = vsel %vm309, %v301, %v306
    %v311 = vrsqrt.pop %v234
    %v312 = vmul.f32 %v311, %v234
    %v313 = vmul.f32 %v312, %v311
    %v314 = vmul.f32 0.5, %v313
    %v315 = vsub.f32 1.5, %v314
    %v316 = vmul.f32 %v311, %v315
    %vm317 = vweird.f32 %v234
    %vm318 = vweird.f32 %v311
    %vm319 = vmor %vm317, %vm318
    %v320 = vsel %vm319, %v311, %v316
    %v321 = vrsqrt.pop %v235
    %v322 = vmul.f32 %v321, %v235
    %v323 = vmul.f32 %v322, %v321
    %v324 = vmul.f32 0.5, %v323
    %v325 = vsub.f32 1.5, %v324
    %v326 = vmul.f32 %v321, %v325
    %vm327 = vweird.f32 %v235
    %vm328 = vweird.f32 %v321
    %vm329 = vmor %vm327, %vm328
    %v330 = vsel %vm329, %v321, %v326
    %v331 = vrsqrt.pop %v236
    %v332 = vmul.f32 %v331, %v236
    %v333 = vmul.f32 %v332, %v331
    %v334 = vmul.f32 0.5, %v333
    %v335 = vsub.f32 1.5, %v334
    %v336 = vmul.f32 %v331, %v335
    %vm337 = vweird.f32 %v236
    %vm338 = vweird.f32 %v331
    %vm339 = vmor %vm337, %vm338
    %v340 = vsel %vm339, %v331, %v336
    %v341 = vrsqrt.pop %v237
    %v342 = vmul.f32 %v341, %v237
    %v343 = vmul.f32 %v342, %v341
    %v344 = vmul.f32 0.5, %v343
    %v345 = vsub.f32 1.5, %v344
    %v346 = vmul.f32 %v341, %v345
    %vm347 = vweird.f32 %v237
    %vm348 = vweird.f32 %v341
    %vm349 = vmor %vm347, %vm348
    %v350 = vsel %vm349, %v341, %v346
    %v351 = vrsqrt.pop %v238
    %v352 = vmul.f32 %v351, %v238
    %v353 = vmul.f32 %v352, %v351
    %v354 = vmul.f32 0.5, %v353
    %v355 = vsub.f32 1.5, %v354
    %v356 = vmul.f32 %v351, %v355
    %vm357 = vweird.f32 %v238
    %vm358 = vweird.f32 %v351
    %vm359 = vmor %vm357, %vm358
    %v360 = vsel %vm359, %v351, %v356
    %v361 = vrsqrt.pop %v239
    %v362 = vmul.f32 %v361, %v239
    %v363 = vmul.f32 %v362, %v361
    %v364 = vmul.f32 0.5, %v363
    %v365 = vsub.f32 1.5, %v364
    %v366 = vmul.f32 %v361, %v365
    %vm367 = vweird.f32 %v239
    %vm368 = vweird.f32 %v361
    %vm369 = vmor %vm367, %vm368
    %v370 = vsel %vm369, %v361, %v366
    %v371 = vrsqrt.pop %v240
    %v372 = vmul.f32 %v371, %v240
    %v373 = vmul.f32 %v372, %v371
    %v374 = vmul.f32 0.5, %v373
    %v375 = vsub.f32 1.5, %v374
    %v376 = vmul.f32 %v371, %v375
    %vm377 = vweird.f32 %v240
    %vm378 = vweird.f32 %v371
    %vm379 = vmor %vm377, %vm378
    %v380 = vsel %vm379, %v371, %v376
    %v381 = vrsqrt.pop %v241
    %v382 = vmul.f32 %v381, %v241
    %v383 = vmul.f32 %v382, %v381
    %v384 = vmul.f32 0.5, %v383
    %v385 = vsub.f32 1.5, %v384
    %v386 = vmul.f32 %v381, %v385
    %vm387 = vweird.f32 %v241
    %vm388 = vweird.f32 %v381
    %vm389 = vmor %vm387, %vm388
    %v390 = vsel %vm389, %v381, %v386
    %v391 = vrsqrt.pop %v242
    %v392 = vmul.f32 %v391, %v242
    %v393 = vmul.f32 %v392, %v391
    %v394 = vmul.f32 0.5, %v393
    %v395 = vsub.f32 1.5, %v394
    %v396 = vmul.f32 %v391, %v395
    %vm397 = vweird.f32 %v242
    %vm398 = vweird.f32 %v391
    %vm399 = vmor %vm397, %vm398
    %v400 = vsel %vm399, %v391, %v396
    %v401 = vrsqrt.pop %v243
    %v402 = vmul.f32 %v401, %v243
    %v403 = vmul.f32 %v402, %v401
    %v404 = vmul.f32 0.5, %v403
    %v405 = vsub.f32 1.5, %v404
    %v406 = vmul.f32 %v401, %v405
    %vm407 = vweird.f32 %v243
    %vm408 = vweird.f32 %v401
    %vm409 = vmor %vm407, %vm408
    %v410 = vsel %vm409, %v401, %v406
    %v411 = vrsqrt.pop %v244
    %v412 = vmul.f32 %v411, %v244
    %v413 = vmul.f32 %v412, %v411
    %v414 = vmul.f32 0.5, %v413
    %v415 = vsub.f32 1.5, %v414
    %v416 = vmul.f32 %v411, %v415
    %vm417 = vweird.f32 %v244
    %vm418 = vweird.f32 %v411
    %vm419 = vmor %vm417, %vm418
    %v420 = vsel %vm419, %v411, %v416
    %v421 = vrsqrt.pop %v245
    %v422 = vmul.f32 %v421, %v245
    %v423 = vmul.f32 %v422, %v421
    %v424 = vmul.f32 0.5, %v423
    %v425 = vsub.f32 1.5, %v424
    %v426 = vmul.f32 %v421, %v425
    %vm427 = vweird.f32 %v245
    %vm428 = vweird.f32 %v421
    %vm429 = vmor %vm427, %vm428
    %v430 = vsel %vm429, %v421, %v426
    %v431 = vrsqrt.pop %v246
    %v432 = vmul.f32 %v431, %v246
    %v433 = vmul.f32 %v432, %v431
    %v434 = vmul.f32 0.5, %v433
    %v435 = vsub.f32 1.5, %v434
    %v436 = vmul.f32 %v431, %v435
    %vm437 = vweird.f32 %v246
    %vm438 = vweird.f32 %v431
    %vm439 = vmor %vm437, %vm438
    %v440 = vsel %vm439, %v431, %v436
    %v441 = vrsqrt.pop %v247
    %v442 = vmul.f32 %v441, %v247
    %v443 = vmul.f32 %v442, %v441
    %v444 = vmul.f32 0.5, %v443
    %v445 = vsub.f32 1.5, %v444
    %v446 = vmul.f32 %v441, %v445
    %vm447 = vweird.f32 %v247
    %vm448 = vweird.f32 %v441
    %vm449 = vmor %vm447, %vm448
    %v450 = vsel %vm449, %v441, %v446
    %v451 = vrsqrt.pop %v248
    %v452 = vmul.f32 %v451, %v248
    %v453 = vmul.f32 %v452, %v451
    %v454 = vmul.f32 0.5, %v453
    %v455 = vsub.f32 1.5, %v454
    %v456 = vmul.f32 %v451, %v455
    %vm457 = vweird.f32 %v248
    %vm458 = vweird.f32 %v451
    %vm459 = vmor %vm457, %vm458
    %v460 = vsel %vm459, %v451, %v456
    %v461 = vrsqrt.pop %v249
    %v462 = vmul.f32 %v461, %v249
    %v463 = vmul.f32 %v462, %v461
    %v464 = vmul.f32 0.5, %v463
    %v465 = vsub.f32 1.5, %v464
    %v466 = vmul.f32 %v461, %v465
    %vm467 = vweird.f32 %v249
    %vm468 = vweird.f32 %v461
    %vm469 = vmor %vm467, %vm468
    %v470 = vsel %vm469, %v461, %v466
    %v471 = vrsqrt.pop %v250
    %v472 = vmul.f32 %v471, %v250
    %v473 = vmul.f32 %v472, %v471
    %v474 = vmul.f32 0.5, %v473
    %v475 = vsub.f32 1.5, %v474
    %v476 = vmul.f32 %v471, %v475
    %vm477 = vweird.f32 %v250
    %vm478 = vweird.f32 %v471
    %vm479 = vmor %vm477, %vm478
    %v480 = vsel %vm479, %v471, %v476
    %v481 = vrsqrt.pop %v251
    %v482 = vmul.f32 %v481, %v251
    %v483 = vmul.f32 %v482, %v481
    %v484 = vmul.f32 0.5, %v483
    %v485 = vsub.f32 1.5, %v484
    %v486 = vmul.f32 %v481, %v485
    %vm487 = vweird.f32 %v251
    %vm488 = vweird.f32 %v481
    %vm489 = vmor %vm487, %vm488
    %v490 = vsel %vm489, %v481, %v486
    %v491 = vrsqrt.pop %v252
    %v492 = vmul.f32 %v491, %v252
    %v493 = vmul.f32 %v492, %v491
    %v494 = vmul.f32 0.5, %v493
    %v495 = vsub.f32 1.5, %v494
    %v496 = vmul.f32 %v491, %v495
    %vm497 = vweird.f32 %v252
    %vm498 = vweird.f32 %v491
    %vm499 = vmor %vm497, %vm498
    %v500 = vsel %vm499, %v491, %v496
    %v501 = vrsqrt.pop %v253
    %v502 = vmul.f32 %v501, %v253
    %v503 = vmul.f32 %v502, %v501
    %v504 = vmul.f32 0.5, %v503
    %v505 = vsub.f32 1.5, %v504
    %v506 = vmul.f32 %v501, %v505
    %vm507 = vweird.f32 %v253
    %vm508 = vweird.f32 %v501
    %vm509 = vmor %vm507, %vm508
    %v510 = vsel %vm509, %v501, %v506
    %v511 = vrsqrt.pop %v254
    %v512 = vmul.f32 %v511, %v254
    %v513 = vmul.f32 %v512, %v511
    %v514 = vmul.f32 0.5, %v513
    %v515 = vsub.f32 1.5, %v514
    %v516 = vmul.f32 %v511, %v515
    %vm517 = vweird.f32 %v254
    %vm518 = vweird.f32 %v511
    %vm519 = vmor %vm517, %vm518
    %v520 = vsel %vm519, %v511, %v516
    %v521 = vrsqrt.pop %v255
    %v522 = vmul.f32 %v521, %v255
    %v523 = vmul.f32 %v522, %v521
    %v524 = vmul.f32 0.5, %v523
    %v525 = vsub.f32 1.5, %v524
    %v526 = vmul.f32 %v521, %v525
    %vm527 = vweird.f32 %v255
    %vm528 = vweird.f32 %v521
    %vm529 = vmor %vm527, %vm528
    %v530 = vsel %vm529, %v521, %v526
    %v531 = vrsqrt.pop %v256
    %v532 = vmul.f32 %v531, %v256
    %v533 = vmul.f32 %v532, %v531
    %v534 = vmul.f32 0.5, %v533
    %v535 = vsub.f32 1.5, %v534
    %v536 = vmul.f32 %v531, %v535
    %vm537 = vweird.f32 %v256
    %vm538 = vweird.f32 %v531
    %vm539 = vmor %vm537, %vm538
    %v540 = vsel %vm539, %v531, %v536
    %v541 = vrsqrt.pop %v257
    %v542 = vmul.f32 %v541, %v257
    %v543 = vmul.f32 %v542, %v541
    %v544 = vmul.f32 0.5, %v543
    %v545 = vsub.f32 1.5, %v544
    %v546 = vmul.f32 %v541, %v545
    %vm547 = vweird.f32 %v257
    %vm548 = vweird.f32 %v541
    %vm549 = vmor %vm547, %vm548
    %v550 = vsel %vm549, %v541, %v546
    %v551 = vrsqrt.pop %v258
    %v552 = vmul.f32 %v551, %v258
    %v553 = vmul.f32 %v552, %v551
    %v554 = vmul.f32 0.5, %v553
    %v555 = vsub.f32 1.5, %v554
    %v556 = vmul.f32 %v551, %v555
    %vm557 = vweird.f32 %v258
    %vm558 = vweird.f32 %v551
    %vm559 = vmor %vm557, %vm558
    %v560 = vsel %vm559, %v551, %v556
    %v561 = vrsqrt.pop %v259
    %v562 = vmul.f32 %v561, %v259
    %v563 = vmul.f32 %v562, %v561
    %v564 = vmul.f32 0.5, %v563
    %v565 = vsub.f32 1.5, %v564
    %v566 = vmul.f32 %v561, %v565
    %vm567 = vweird.f32 %v259
    %vm568 = vweird.f32 %v561
    %vm569 = vmor %vm567, %vm568
    %v570 = vsel %vm569, %v561, %v566
    %v571 = vrsqrt.pop %v260
    %v572 = vmul.f32 %v571, %v260
    %v573 = vmul.f32 %v572, %v571
    %v574 = vmul.f32 0.5, %v573
    %v575 = vsub.f32 1.5, %v574
    %v576 = vmul.f32 %v571, %v575
    %vm577 = vweird.f32 %v260
    %vm578 = vweird.f32 %v571
    %vm579 = vmor %vm577, %vm578
    %v580 = vsel %vm579, %v571, %v576
    %v581 = vmul.f32 %v101, %v270
    %v582 = vmul.f32 %v102, %v280
    %v583 = vmul.f32 %v103, %v290
    %v584 = vmul.f32 %v104, %v300
    %v585 = vmul.f32 %v105, %v310
    %v586 = vmul.f32 %v106, %v320
    %v587 = vmul.f32 %v107, %v330
    %v588 = vmul.f32 %v108, %v340
    %v589 = vmul.f32 %v109, %v350
    %v590 = vmul.f32 %v110, %v360
    %v591 = vmul.f32 %v111, %v370
    %v592 = vmul.f32 %v112, %v380
    %v593 = vmul.f32 %v113, %v390
    %v594 = vmul.f32 %v114, %v400
    %v595 = vmul.f32 %v115, %v410
    %v596 = vmul.f32 %v116, %v420
    %v597 = vmul.f32 %v117, %v430
    %v598 = vmul.f32 %v118, %v440
    %v599 = vmul.f32 %v119, %v450
    %v600 = vmul.f32 %v120, %v460
    %v601 = vmul.f32 %v121, %v470
    %v602 = vmul.f32 %v122, %v480
    %v603 = vmul.f32 %v123, %v490
    %v604 = vmul.f32 %v124, %v500
    %v605 = vmul.f32 %v125, %v510
    %v606 = vmul.f32 %v126, %v520
    %v607 = vmul.f32 %v127, %v530
    %v608 = vmul.f32 %v128, %v540
    %v609 = vmul.f32 %v129, %v550
    %v610 = vmul.f32 %v130, %v560
    %v611 = vmul.f32 %v131, %v570
    %v612 = vmul.f32 %v132, %v580
    %v613 = vld [vmem:[#allocation2] sm:$0xff]
    %v614 = vand.u32 %v596, 4294901760
    %615 = vmatpush.xpose.msra.mxu0 %v614
    %v616 = vand.u32 %v595, 4294901760
    %617 = vmatpush.xpose.msra.mxu0 %v616
    %v618 = vand.u32 %v594, 4294901760
    %619 = vmatpush.xpose.msra.mxu0 %v618
    %v620 = vand.u32 %v593, 4294901760
    %621 = vmatpush.xpose.msra.mxu0 %v620
    %v622 = vand.u32 %v592, 4294901760
    %623 = vmatpush.xpose.msra.mxu0 %v622
    %v624 = vand.u32 %v591, 4294901760
    %625 = vmatpush.xpose.msra.mxu0 %v624
    %v626 = vand.u32 %v590, 4294901760
    %627 = vmatpush.xpose.msra.mxu0 %v626
    %v628 = vand.u32 %v589, 4294901760
    %629 = vmatpush.xpose.msra.mxu0 %v628
    %v630 = vand.u32 %v588, 4294901760
    %631 = vmatpush.xpose.msra.mxu0 %v630
    %v632 = vand.u32 %v587, 4294901760
    %633 = vmatpush.xpose.msra.mxu0 %v632
    %v634 = vand.u32 %v586, 4294901760
    %635 = vmatpush.xpose.msra.mxu0 %v634
    %v636 = vand.u32 %v585, 4294901760
    %637 = vmatpush.xpose.msra.mxu0 %v636
    %v638 = vand.u32 %v584, 4294901760
    %639 = vmatpush.xpose.msra.mxu0 %v638
    %v640 = vand.u32 %v583, 4294901760
    %641 = vmatpush.xpose.msra.mxu0 %v640
    %v642 = vand.u32 %v582, 4294901760
    %643 = vmatpush.xpose.msra.mxu0 %v642
    %v644 = vand.u32 %v581, 4294901760
    %645 = vmatpush.xpose.msra.mxu0 %v644
    %v646 = vand.u32 %v613, 4294901760
    %v647 = vsub.f32 %v613, %v646
    %v648 = vand.u32 %v647, 4294901760
    %v649 = vsub.f32 %v647, %v648
    %v650 = vand.u32 %v649, 4294901760
    %651 = vmatmul.f32.gmra.mxu0 %v650
    %v652 = vpop.f32.mrf.mxu0
    %v653 = vadd.f32 0.0, %v652
    %654 = vdwg.mxu0
    %v655 = vand.u32 %v596, 4294901760
    %v656 = vsub.f32 %v596, %v655
    %v657 = vand.u32 %v656, 4294901760
    %v658 = vsub.f32 %v656, %v657
    %v659 = vand.u32 %v658, 4294901760
    %660 = vmatpush.xpose.msra.mxu0 %v659
    %v661 = vand.u32 %v595, 4294901760
    %v662 = vsub.f32 %v595, %v661
    %v663 = vand.u32 %v662, 4294901760
    %v664 = vsub.f32 %v662, %v663
    %v665 = vand.u32 %v664, 4294901760
    %666 = vmatpush.xpose.msra.mxu0 %v665
    %v667 = vand.u32 %v594, 4294901760
    %v668 = vsub.f32 %v594, %v667
    %v669 = vand.u32 %v668, 4294901760
    %v670 = vsub.f32 %v668, %v669
    %v671 = vand.u32 %v670, 4294901760
    %672 = vmatpush.xpose.msra.mxu0 %v671
    %v673 = vand.u32 %v593, 4294901760
    %v674 = vsub.f32 %v593, %v673
    %v675 = vand.u32 %v674, 4294901760
    %v676 = vsub.f32 %v674, %v675
    %v677 = vand.u32 %v676, 4294901760
    %678 = vmatpush.xpose.msra.mxu0 %v677
    %v679 = vand.u32 %v592, 4294901760
    %v680 = vsub.f32 %v592, %v679
    %v681 = vand.u32 %v680, 4294901760
    %v682 = vsub.f32 %v680, %v681
    %v683 = vand.u32 %v682, 4294901760
    %684 = vmatpush.xpose.msra.mxu0 %v683
    %v685 = vand.u32 %v591, 4294901760
    %v686 = vsub.f32 %v591, %v685
    %v687 = vand.u32 %v686, 4294901760
    %v688 = vsub.f32 %v686, %v687
    %v689 = vand.u32 %v688, 4294901760
    %690 = vmatpush.xpose.msra.mxu0 %v689
    %v691 = vand.u32 %v590, 4294901760
    %v692 = vsub.f32 %v590, %v691
    %v693 = vand.u32 %v692, 4294901760
    %v694 = vsub.f32 %v692, %v693
    %v695 = vand.u32 %v694, 4294901760
    %696 = vmatpush.xpose.msra.mxu0 %v695
    %v697 = vand.u32 %v589, 4294901760
    %v698 = vsub.f32 %v589, %v697
    %v699 = vand.u32 %v698, 4294901760
    %v700 = vsub.f32 %v698, %v699
    %v701 = vand.u32 %v700, 4294901760
    %702 = vmatpush.xpose.msra.mxu0 %v701
    %v703 = vand.u32 %v588, 4294901760
    %v704 = vsub.f32 %v588, %v703
    %v705 = vand.u32 %v704, 4294901760
    %v706 = vsub.f32 %v704, %v705
    %v707 = vand.u32 %v706, 4294901760
    %708 = vmatpush.xpose.msra.mxu0 %v707
    %v709 = vand.u32 %v587, 4294901760
    %v710 = vsub.f32 %v587, %v709
    %v711 = vand.u32 %v710, 4294901760
    %v712 = vsub.f32 %v710, %v711
    %v713 = vand.u32 %v712, 4294901760
    %714 = vmatpush.xpose.msra.mxu0 %v713
    %v715 = vand.u32 %v586, 4294901760
    %v716 = vsub.f32 %v586, %v715
    %v717 = vand.u32 %v716, 4294901760
    %v718 = vsub.f32 %v716, %v717
    %v719 = vand.u32 %v718, 4294901760
    %720 = vmatpush.xpose.msra.mxu0 %v719
    %v721 = vand.u32 %v585, 4294901760
    %v722 = vsub.f32 %v585, %v721
    %v723 = vand.u32 %v722, 4294901760
    %v724 = vsub.f32 %v722, %v723
    %v725 = vand.u32 %v724, 4294901760
    %726 = vmatpush.xpose.msra.mxu0 %v725
    %v727 = vand.u32 %v584, 4294901760
    %v728 = vsub.f32 %v584, %v727
    %v729 = vand.u32 %v728, 4294901760
    %v730 = vsub.f32 %v728, %v729
    %v731 = vand.u32 %v730, 4294901760
    %732 = vmatpush.xpose.msra.mxu0 %v731
    %v733 = vand.u32 %v583, 4294901760
    %v734 = vsub.f32 %v583, %v733
    %v735 = vand.u32 %v734, 4294901760
    %v736 = vsub.f32 %v734, %v735
    %v737 = vand.u32 %v736, 4294901760
    %738 = vmatpush.xpose.msra.mxu0 %v737
    %v739 = vand.u32 %v582, 4294901760
    %v740 = vsub.f32 %v582, %v739
    %v741 = vand.u32 %v740, 4294901760
    %v742 = vsub.f32 %v740, %v741
    %v743 = vand.u32 %v742, 4294901760
    %744 = vmatpush.xpose.msra.mxu0 %v743
    %v745 = vand.u32 %v581, 4294901760
    %v746 = vsub.f32 %v581, %v745
    %v747 = vand.u32 %v746, 4294901760
    %v748 = vsub.f32 %v746, %v747
    %v749 = vand.u32 %v748, 4294901760
    %750 = vmatpush.xpose.msra.mxu0 %v749
    %v751 = vand.u32 %v613, 4294901760
    %752 = vmatmul.f32.gmra.mxu0 %v751
    %v753 = vpop.f32.mrf.mxu0
    %v754 = vadd.f32 %v653, %v753
    %755 = vdwg.mxu0
    %v756 = vand.u32 %v596, 4294901760
    %v757 = vsub.f32 %v596, %v756
    %758 = vmatpush.xpose.msra.mxu0 %v757
    %v759 = vand.u32 %v595, 4294901760
    %v760 = vsub.f32 %v595, %v759
    %761 = vmatpush.xpose.msra.mxu0 %v760
    %v762 = vand.u32 %v594, 4294901760
    %v763 = vsub.f32 %v594, %v762
    %764 = vmatpush.xpose.msra.mxu0 %v763
    %v765 = vand.u32 %v593, 4294901760
    %v766 = vsub.f32 %v593, %v765
    %767 = vmatpush.xpose.msra.mxu0 %v766
    %v768 = vand.u32 %v592, 4294901760
    %v769 = vsub.f32 %v592, %v768
    %770 = vmatpush.xpose.msra.mxu0 %v769
    %v771 = vand.u32 %v591, 4294901760
    %v772 = vsub.f32 %v591, %v771
    %773 = vmatpush.xpose.msra.mxu0 %v772
    %v774 = vand.u32 %v590, 4294901760
    %v775 = vsub.f32 %v590, %v774
    %776 = vmatpush.xpose.msra.mxu0 %v775
    %v777 = vand.u32 %v589, 4294901760
    %v778 = vsub.f32 %v589, %v777
    %779 = vmatpush.xpose.msra.mxu0 %v778
    %v780 = vand.u32 %v588, 4294901760
    %v781 = vsub.f32 %v588, %v780
    %782 = vmatpush.xpose.msra.mxu0 %v781
    %v783 = vand.u32 %v587, 4294901760
    %v784 = vsub.f32 %v587, %v783
    %785 = vmatpush.xpose.msra.mxu0 %v784
    %v786 = vand.u32 %v586, 4294901760
    %v787 = vsub.f32 %v586, %v786
    %788 = vmatpush.xpose.msra.mxu0 %v787
    %v789 = vand.u32 %v585, 4294901760
    %v790 = vsub.f32 %v585, %v789
    %791 = vmatpush.xpose.msra.mxu0 %v790
    %v792 = vand.u32 %v584, 4294901760
    %v793 = vsub.f32 %v584, %v792
    %794 = vmatpush.xpose.msra.mxu0 %v793
    %v795 = vand.u32 %v583, 4294901760
    %v796 = vsub.f32 %v583, %v795
    %797 = vmatpush.xpose.msra.mxu0 %v796
    %v798 = vand.u32 %v582, 4294901760
    %v799 = vsub.f32 %v582, %v798
    %800 = vmatpush.xpose.msra.mxu0 %v799
    %v801 = vand.u32 %v581, 4294901760
    %v802 = vsub.f32 %v581, %v801
    %803 = vmatpush.xpose.msra.mxu0 %v802
    %v804 = vand.u32 %v613, 4294901760
    %v805 = vsub.f32 %v613, %v804
    %806 = vmatmul.f32.gmra.mxu0 %v805
    %v807 = vpop.f32.mrf.mxu0
    %v808 = vadd.f32 %v754, %v807
    %809 = vdwg.mxu0
    %v810 = vand.u32 %v596, 4294901760
    %811 = vmatpush.xpose.msra.mxu0 %v810
    %v812 = vand.u32 %v595, 4294901760
    %813 = vmatpush.xpose.msra.mxu0 %v812
    %v814 = vand.u32 %v594, 4294901760
    %815 = vmatpush.xpose.msra.mxu0 %v814
    %v816 = vand.u32 %v593, 4294901760
    %817 = vmatpush.xpose.msra.mxu0 %v816
    %v818 = vand.u32 %v592, 4294901760
    %819 = vmatpush.xpose.msra.mxu0 %v818
    %v820 = vand.u32 %v591, 4294901760
    %821 = vmatpush.xpose.msra.mxu0 %v820
    %v822 = vand.u32 %v590, 4294901760
    %823 = vmatpush.xpose.msra.mxu0 %v822
    %v824 = vand.u32 %v589, 4294901760
    %825 = vmatpush.xpose.msra.mxu0 %v824
    %v826 = vand.u32 %v588, 4294901760
    %827 = vmatpush.xpose.msra.mxu0 %v826
    %v828 = vand.u32 %v587, 4294901760
    %829 = vmatpush.xpose.msra.mxu0 %v828
    %v830 = vand.u32 %v586, 4294901760
    %831 = vmatpush.xpose.msra.mxu0 %v830
    %v832 = vand.u32 %v585, 4294901760
    %833 = vmatpush.xpose.msra.mxu0 %v832
    %v834 = vand.u32 %v584, 4294901760
    %835 = vmatpush.xpose.msra.mxu0 %v834
    %v836 = vand.u32 %v583, 4294901760
    %837 = vmatpush.xpose.msra.mxu0 %v836
    %v838 = vand.u32 %v582, 4294901760
    %839 = vmatpush.xpose.msra.mxu0 %v838
    %v840 = vand.u32 %v581, 4294901760
    %841 = vmatpush.xpose.msra.mxu0 %v840
    %v842 = vand.u32 %v613, 4294901760
    %v843 = vsub.f32 %v613, %v842
    %v844 = vand.u32 %v843, 4294901760
    %845 = vmatmul.f32.gmra.mxu0 %v844
    %v846 = vpop.f32.mrf.mxu0
    %v847 = vadd.f32 %v808, %v846
    %848 = vdwg.mxu0
    %v849 = vand.u32 %v596, 4294901760
    %v850 = vsub.f32 %v596, %v849
    %v851 = vand.u32 %v850, 4294901760
    %852 = vmatpush.xpose.msra.mxu0 %v851
    %v853 = vand.u32 %v595, 4294901760
    %v854 = vsub.f32 %v595, %v853
    %v855 = vand.u32 %v854, 4294901760
    %856 = vmatpush.xpose.msra.mxu0 %v855
    %v857 = vand.u32 %v594, 4294901760
    %v858 = vsub.f32 %v594, %v857
    %v859 = vand.u32 %v858, 4294901760
    %860 = vmatpush.xpose.msra.mxu0 %v859
    %v861 = vand.u32 %v593, 4294901760
    %v862 = vsub.f32 %v593, %v861
    %v863 = vand.u32 %v862, 4294901760
    %864 = vmatpush.xpose.msra.mxu0 %v863
    %v865 = vand.u32 %v592, 4294901760
    %v866 = vsub.f32 %v592, %v865
    %v867 = vand.u32 %v866, 4294901760
    %868 = vmatpush.xpose.msra.mxu0 %v867
    %v869 = vand.u32 %v591, 4294901760
    %v870 = vsub.f32 %v591, %v869
    %v871 = vand.u32 %v870, 4294901760
    %872 = vmatpush.xpose.msra.mxu0 %v871
    %v873 = vand.u32 %v590, 4294901760
    %v874 = vsub.f32 %v590, %v873
    %v875 = vand.u32 %v874, 4294901760
    %876 = vmatpush.xpose.msra.mxu0 %v875
    %v877 = vand.u32 %v589, 4294901760
    %v878 = vsub.f32 %v589, %v877
    %v879 = vand.u32 %v878, 4294901760
    %880 = vmatpush.xpose.msra.mxu0 %v879
    %v881 = vand.u32 %v588, 4294901760
    %v882 = vsub.f32 %v588, %v881
    %v883 = vand.u32 %v882, 4294901760
    %884 = vmatpush.xpose.msra.mxu0 %v883
    %v885 = vand.u32 %v587, 4294901760
    %v886 = vsub.f32 %v587, %v885
    %v887 = vand.u32 %v886, 4294901760
    %888 = vmatpush.xpose.msra.mxu0 %v887
    %v889 = vand.u32 %v586, 4294901760
    %v890 = vsub.f32 %v586, %v889
    %v891 = vand.u32 %v890, 4294901760
    %892 = vmatpush.xpose.msra.mxu0 %v891
    %v893 = vand.u32 %v585, 4294901760
    %v894 = vsub.f32 %v585, %v893
    %v895 = vand.u32 %v894, 4294901760
    %896 = vmatpush.xpose.msra.mxu0 %v895
    %v897 = vand.u32 %v584, 4294901760
    %v898 = vsub.f32 %v584, %v897
    %v899 = vand.u32 %v898, 4294901760
    %900 = vmatpush.xpose.msra.mxu0 %v899
    %v901 = vand.u32 %v583, 4294901760
    %v902 = vsub.f32 %v583, %v901
    %v903 = vand.u32 %v902, 4294901760
    %904 = vmatpush.xpose.msra.mxu0 %v903
    %v905 = vand.u32 %v582, 4294901760
    %v906 = vsub.f32 %v582, %v905
    %v907 = vand.u32 %v906, 4294901760
    %908 = vmatpush.xpose.msra.mxu0 %v907
    %v909 = vand.u32 %v581, 4294901760
    %v910 = vsub.f32 %v581, %v909
    %v911 = vand.u32 %v910, 4294901760
    %912 = vmatpush.xpose.msra.mxu0 %v911
    %v913 = vand.u32 %v613, 4294901760
    %914 = vmatmul.f32.gmra.mxu0 %v913
    %v915 = vpop.f32.mrf.mxu0
    %v916 = vadd.f32 %v847, %v915
    %917 = vdwg.mxu0
    %v918 = vand.u32 %v596, 4294901760
    %919 = vmatpush.xpose.msra.mxu0 %v918
    %v920 = vand.u32 %v595, 4294901760
    %921 = vmatpush.xpose.msra.mxu0 %v920
    %v922 = vand.u32 %v594, 4294901760
    %923 = vmatpush.xpose.msra.mxu0 %v922
    %v924 = vand.u32 %v593, 4294901760
    %925 = vmatpush.xpose.msra.mxu0 %v924
    %v926 = vand.u32 %v592, 4294901760
    %927 = vmatpush.xpose.msra.mxu0 %v926
    %v928 = vand.u32 %v591, 4294901760
    %929 = vmatpush.xpose.msra.mxu0 %v928
    %v930 = vand.u32 %v590, 4294901760
    %931 = vmatpush.xpose.msra.mxu0 %v930
    %v932 = vand.u32 %v589, 4294901760
    %933 = vmatpush.xpose.msra.mxu0 %v932
    %v934 = vand.u32 %v588, 4294901760
    %935 = vmatpush.xpose.msra.mxu0 %v934
    %v936 = vand.u32 %v587, 4294901760
    %937 = vmatpush.xpose.msra.mxu0 %v936
    %v938 = vand.u32 %v586, 4294901760
    %939 = vmatpush.xpose.msra.mxu0 %v938
    %v940 = vand.u32 %v585, 4294901760
    %941 = vmatpush.xpose.msra.mxu0 %v940
    %v942 = vand.u32 %v584, 4294901760
    %943 = vmatpush.xpose.msra.mxu0 %v942
    %v944 = vand.u32 %v583, 4294901760
    %945 = vmatpush.xpose.msra.mxu0 %v944
    %v946 = vand.u32 %v582, 4294901760
    %947 = vmatpush.xpose.msra.mxu0 %v946
    %v948 = vand.u32 %v581, 4294901760
    %949 = vmatpush.xpose.msra.mxu0 %v948
    %v950 = vand.u32 %v613, 4294901760
    %951 = vmatmul.f32.gmra.mxu0 %v950
    %v952 = vpop.f32.mrf.mxu0
    %v953 = vadd.f32 %v916, %v952
    %954 = vdwg.mxu0
    %v955 = vand.u32 %v612, 4294901760
    %956 = vmatpush.xpose.msra.mxu0 %v955
    %v957 = vand.u32 %v611, 4294901760
    %958 = vmatpush.xpose.msra.mxu0 %v957
    %v959 = vand.u32 %v610, 4294901760
    %960 = vmatpush.xpose.msra.mxu0 %v959
    %v961 = vand.u32 %v609, 4294901760
    %962 = vmatpush.xpose.msra.mxu0 %v961
    %v963 = vand.u32 %v608, 4294901760
    %964 = vmatpush.xpose.msra.mxu0 %v963
    %v965 = vand.u32 %v607, 4294901760
    %966 = vmatpush.xpose.msra.mxu0 %v965
    %v967 = vand.u32 %v606, 4294901760
    %968 = vmatpush.xpose.msra.mxu0 %v967
    %v969 = vand.u32 %v605, 4294901760
    %970 = vmatpush.xpose.msra.mxu0 %v969
    %v971 = vand.u32 %v604, 4294901760
    %972 = vmatpush.xpose.msra.mxu0 %v971
    %v973 = vand.u32 %v603, 4294901760
    %974 = vmatpush.xpose.msra.mxu0 %v973
    %v975 = vand.u32 %v602, 4294901760
    %976 = vmatpush.xpose.msra.mxu0 %v975
    %v977 = vand.u32 %v601, 4294901760
    %978 = vmatpush.xpose.msra.mxu0 %v977
    %v979 = vand.u32 %v600, 4294901760
    %980 = vmatpush.xpose.msra.mxu0 %v979
    %v981 = vand.u32 %v599, 4294901760
    %982 = vmatpush.xpose.msra.mxu0 %v981
    %v983 = vand.u32 %v598, 4294901760
    %984 = vmatpush.xpose.msra.mxu0 %v983
    %v985 = vand.u32 %v597, 4294901760
    %986 = vmatpush.xpose.msra.mxu0 %v985
    %v987 = vand.u32 %v613, 4294901760
    %v988 = vsub.f32 %v613, %v987
    %v989 = vand.u32 %v988, 4294901760
    %v990 = vsub.f32 %v988, %v989
    %v991 = vand.u32 %v990, 4294901760
    %992 = vmatmul.f32.gmra.mxu0 %v991
    %v993 = vpop.f32.mrf.mxu0
    %v994 = vadd.f32 0.0, %v993
    %995 = vdwg.mxu0
    %v996 = vand.u32 %v612, 4294901760
    %v997 = vsub.f32 %v612, %v996
    %v998 = vand.u32 %v997, 4294901760
    %v999 = vsub.f32 %v997, %v998
    %v1000 = vand.u32 %v999, 4294901760
    %1001 = vmatpush.xpose.msra.mxu0 %v1000
    %v1002 = vand.u32 %v611, 4294901760
    %v1003 = vsub.f32 %v611, %v1002
    %v1004 = vand.u32 %v1003, 4294901760
    %v1005 = vsub.f32 %v1003, %v1004
    %v1006 = vand.u32 %v1005, 4294901760
    %1007 = vmatpush.xpose.msra.mxu0 %v1006
    %v1008 = vand.u32 %v610, 4294901760
    %v1009 = vsub.f32 %v610, %v1008
    %v1010 = vand.u32 %v1009, 4294901760
    %v1011 = vsub.f32 %v1009, %v1010
    %v1012 = vand.u32 %v1011, 4294901760
    %1013 = vmatpush.xpose.msra.mxu0 %v1012
    %v1014 = vand.u32 %v609, 4294901760
    %v1015 = vsub.f32 %v609, %v1014
    %v1016 = vand.u32 %v1015, 4294901760
    %v1017 = vsub.f32 %v1015, %v1016
    %v1018 = vand.u32 %v1017, 4294901760
    %1019 = vmatpush.xpose.msra.mxu0 %v1018
    %v1020 = vand.u32 %v608, 4294901760
    %v1021 = vsub.f32 %v608, %v1020
    %v1022 = vand.u32 %v1021, 4294901760
    %v1023 = vsub.f32 %v1021, %v1022
    %v1024 = vand.u32 %v1023, 4294901760
    %1025 = vmatpush.xpose.msra.mxu0 %v1024
    %v1026 = vand.u32 %v607, 4294901760
    %v1027 = vsub.f32 %v607, %v1026
    %v1028 = vand.u32 %v1027, 4294901760
    %v1029 = vsub.f32 %v1027, %v1028
    %v1030 = vand.u32 %v1029, 4294901760
    %1031 = vmatpush.xpose.msra.mxu0 %v1030
    %v1032 = vand.u32 %v606, 4294901760
    %v1033 = vsub.f32 %v606, %v1032
    %v1034 = vand.u32 %v1033, 4294901760
    %v1035 = vsub.f32 %v1033, %v1034
    %v1036 = vand.u32 %v1035, 4294901760
    %1037 = vmatpush.xpose.msra.mxu0 %v1036
    %v1038 = vand.u32 %v605, 4294901760
    %v1039 = vsub.f32 %v605, %v1038
    %v1040 = vand.u32 %v1039, 4294901760
    %v1041 = vsub.f32 %v1039, %v1040
    %v1042 = vand.u32 %v1041, 4294901760
    %1043 = vmatpush.xpose.msra.mxu0 %v1042
    %v1044 = vand.u32 %v604, 4294901760
    %v1045 = vsub.f32 %v604, %v1044
    %v1046 = vand.u32 %v1045, 4294901760
    %v1047 = vsub.f32 %v1045, %v1046
    %v1048 = vand.u32 %v1047, 4294901760
    %1049 = vmatpush.xpose.msra.mxu0 %v1048
    %v1050 = vand.u32 %v603, 4294901760
    %v1051 = vsub.f32 %v603, %v1050
    %v1052 = vand.u32 %v1051, 4294901760
    %v1053 = vsub.f32 %v1051, %v1052
    %v1054 = vand.u32 %v1053, 4294901760
    %1055 = vmatpush.xpose.msra.mxu0 %v1054
    %v1056 = vand.u32 %v602, 4294901760
    %v1057 = vsub.f32 %v602, %v1056
    %v1058 = vand.u32 %v1057, 4294901760
    %v1059 = vsub.f32 %v1057, %v1058
    %v1060 = vand.u32 %v1059, 4294901760
    %1061 = vmatpush.xpose.msra.mxu0 %v1060
    %v1062 = vand.u32 %v601, 4294901760
    %v1063 = vsub.f32 %v601, %v1062
    %v1064 = vand.u32 %v1063, 4294901760
    %v1065 = vsub.f32 %v1063, %v1064
    %v1066 = vand.u32 %v1065, 4294901760
    %1067 = vmatpush.xpose.msra.mxu0 %v1066
    %v1068 = vand.u32 %v600, 4294901760
    %v1069 = vsub.f32 %v600, %v1068
    %v1070 = vand.u32 %v1069, 4294901760
    %v1071 = vsub.f32 %v1069, %v1070
    %v1072 = vand.u32 %v1071, 4294901760
    %1073 = vmatpush.xpose.msra.mxu0 %v1072
    %v1074 = vand.u32 %v599, 4294901760
    %v1075 = vsub.f32 %v599, %v1074
    %v1076 = vand.u32 %v1075, 4294901760
    %v1077 = vsub.f32 %v1075, %v1076
    %v1078 = vand.u32 %v1077, 4294901760
    %1079 = vmatpush.xpose.msra.mxu0 %v1078
    %v1080 = vand.u32 %v598, 4294901760
    %v1081 = vsub.f32 %v598, %v1080
    %v1082 = vand.u32 %v1081, 4294901760
    %v1083 = vsub.f32 %v1081, %v1082
    %v1084 = vand.u32 %v1083, 4294901760
    %1085 = vmatpush.xpose.msra.mxu0 %v1084
    %v1086 = vand.u32 %v597, 4294901760
    %v1087 = vsub.f32 %v597, %v1086
    %v1088 = vand.u32 %v1087, 4294901760
    %v1089 = vsub.f32 %v1087, %v1088
    %v1090 = vand.u32 %v1089, 4294901760
    %1091 = vmatpush.xpose.msra.mxu0 %v1090
    %v1092 = vand.u32 %v613, 4294901760
    %1093 = vmatmul.f32.gmra.mxu0 %v1092
    %v1094 = vpop.f32.mrf.mxu0
    %v1095 = vadd.f32 %v994, %v1094
    %1096 = vdwg.mxu0
    %v1097 = vand.u32 %v612, 4294901760
    %v1098 = vsub.f32 %v612, %v1097
    %1099 = vmatpush.xpose.msra.mxu0 %v1098
    %v1100 = vand.u32 %v611, 4294901760
    %v1101 = vsub.f32 %v611, %v1100
    %1102 = vmatpush.xpose.msra.mxu0 %v1101
    %v1103 = vand.u32 %v610, 4294901760
    %v1104 = vsub.f32 %v610, %v1103
    %1105 = vmatpush.xpose.msra.mxu0 %v1104
    %v1106 = vand.u32 %v609, 4294901760
    %v1107 = vsub.f32 %v609, %v1106
    %1108 = vmatpush.xpose.msra.mxu0 %v1107
    %v1109 = vand.u32 %v608, 4294901760
    %v1110 = vsub.f32 %v608, %v1109
    %1111 = vmatpush.xpose.msra.mxu0 %v1110
    %v1112 = vand.u32 %v607, 4294901760
    %v1113 = vsub.f32 %v607, %v1112
    %1114 = vmatpush.xpose.msra.mxu0 %v1113
    %v1115 = vand.u32 %v606, 4294901760
    %v1116 = vsub.f32 %v606, %v1115
    %1117 = vmatpush.xpose.msra.mxu0 %v1116
    %v1118 = vand.u32 %v605, 4294901760
    %v1119 = vsub.f32 %v605, %v1118
    %1120 = vmatpush.xpose.msra.mxu0 %v1119
    %v1121 = vand.u32 %v604, 4294901760
    %v1122 = vsub.f32 %v604, %v1121
    %1123 = vmatpush.xpose.msra.mxu0 %v1122
    %v1124 = vand.u32 %v603, 4294901760
    %v1125 = vsub.f32 %v603, %v1124
    %1126 = vmatpush.xpose.msra.mxu0 %v1125
    %v1127 = vand.u32 %v602, 4294901760
    %v1128 = vsub.f32 %v602, %v1127
    %1129 = vmatpush.xpose.msra.mxu0 %v1128
    %v1130 = vand.u32 %v601, 4294901760
    %v1131 = vsub.f32 %v601, %v1130
    %1132 = vmatpush.xpose.msra.mxu0 %v1131
    %v1133 = vand.u32 %v600, 4294901760
    %v1134 = vsub.f32 %v600, %v1133
    %1135 = vmatpush.xpose.msra.mxu0 %v1134
    %v1136 = vand.u32 %v599, 4294901760
    %v1137 = vsub.f32 %v599, %v1136
    %1138 = vmatpush.xpose.msra.mxu0 %v1137
    %v1139 = vand.u32 %v598, 4294901760
    %v1140 = vsub.f32 %v598, %v1139
    %1141 = vmatpush.xpose.msra.mxu0 %v1140
    %v1142 = vand.u32 %v597, 4294901760
    %v1143 = vsub.f32 %v597, %v1142
    %1144 = vmatpush.xpose.msra.mxu0 %v1143
    %v1145 = vand.u32 %v613, 4294901760
    %v1146 = vsub.f32 %v613, %v1145
    %1147 = vmatmul.f32.gmra.mxu0 %v1146
    %v1148 = vpop.f32.mrf.mxu0
    %v1149 = vadd.f32 %v1095, %v1148
    %1150 = vdwg.mxu0
    %v1151 = vand.u32 %v612, 4294901760
    %1152 = vmatpush.xpose.msra.mxu0 %v1151
    %v1153 = vand.u32 %v611, 4294901760
    %1154 = vmatpush.xpose.msra.mxu0 %v1153
    %v1155 = vand.u32 %v610, 4294901760
    %1156 = vmatpush.xpose.msra.mxu0 %v1155
    %v1157 = vand.u32 %v609, 4294901760
    %1158 = vmatpush.xpose.msra.mxu0 %v1157
    %v1159 = vand.u32 %v608, 4294901760
    %1160 = vmatpush.xpose.msra.mxu0 %v1159
    %v1161 = vand.u32 %v607, 4294901760
    %1162 = vmatpush.xpose.msra.mxu0 %v1161
    %v1163 = vand.u32 %v606, 4294901760
    %1164 = vmatpush.xpose.msra.mxu0 %v1163
    %v1165 = vand.u32 %v605, 4294901760
    %1166 = vmatpush.xpose.msra.mxu0 %v1165
    %v1167 = vand.u32 %v604, 4294901760
    %1168 = vmatpush.xpose.msra.mxu0 %v1167
    %v1169 = vand.u32 %v603, 4294901760
    %1170 = vmatpush.xpose.msra.mxu0 %v1169
    %v1171 = vand.u32 %v602, 4294901760
    %1172 = vmatpush.xpose.msra.mxu0 %v1171
    %v1173 = vand.u32 %v601, 4294901760
    %1174 = vmatpush.xpose.msra.mxu0 %v1173
    %v1175 = vand.u32 %v600, 4294901760
    %1176 = vmatpush.xpose.msra.mxu0 %v1175
    %v1177 = vand.u32 %v599, 4294901760
    %1178 = vmatpush.xpose.msra.mxu0 %v1177
    %v1179 = vand.u32 %v598, 4294901760
    %1180 = vmatpush.xpose.msra.mxu0 %v1179
    %v1181 = vand.u32 %v597, 4294901760
    %1182 = vmatpush.xpose.msra.mxu0 %v1181
    %v1183 = vand.u32 %v613, 4294901760
    %v1184 = vsub.f32 %v613, %v1183
    %v1185 = vand.u32 %v1184, 4294901760
    %1186 = vmatmul.f32.gmra.mxu0 %v1185
    %v1187 = vpop.f32.mrf.mxu0
    %v1188 = vadd.f32 %v1149, %v1187
    %1189 = vdwg.mxu0
    %v1190 = vand.u32 %v612, 4294901760
    %v1191 = vsub.f32 %v612, %v1190
    %v1192 = vand.u32 %v1191, 4294901760
    %1193 = vmatpush.xpose.msra.mxu0 %v1192
    %v1194 = vand.u32 %v611, 4294901760
    %v1195 = vsub.f32 %v611, %v1194
    %v1196 = vand.u32 %v1195, 4294901760
    %1197 = vmatpush.xpose.msra.mxu0 %v1196
    %v1198 = vand.u32 %v610, 4294901760
    %v1199 = vsub.f32 %v610, %v1198
    %v1200 = vand.u32 %v1199, 4294901760
    %1201 = vmatpush.xpose.msra.mxu0 %v1200
    %v1202 = vand.u32 %v609, 4294901760
    %v1203 = vsub.f32 %v609, %v1202
    %v1204 = vand.u32 %v1203, 4294901760
    %1205 = vmatpush.xpose.msra.mxu0 %v1204
    %v1206 = vand.u32 %v608, 4294901760
    %v1207 = vsub.f32 %v608, %v1206
    %v1208 = vand.u32 %v1207, 4294901760
    %1209 = vmatpush.xpose.msra.mxu0 %v1208
    %v1210 = vand.u32 %v607, 4294901760
    %v1211 = vsub.f32 %v607, %v1210
    %v1212 = vand.u32 %v1211, 4294901760
    %1213 = vmatpush.xpose.msra.mxu0 %v1212
    %v1214 = vand.u32 %v606, 4294901760
    %v1215 = vsub.f32 %v606, %v1214
    %v1216 = vand.u32 %v1215, 4294901760
    %1217 = vmatpush.xpose.msra.mxu0 %v1216
    %v1218 = vand.u32 %v605, 4294901760
    %v1219 = vsub.f32 %v605, %v1218
    %v1220 = vand.u32 %v1219, 4294901760
    %1221 = vmatpush.xpose.msra.mxu0 %v1220
    %v1222 = vand.u32 %v604, 4294901760
    %v1223 = vsub.f32 %v604, %v1222
    %v1224 = vand.u32 %v1223, 4294901760
    %1225 = vmatpush.xpose.msra.mxu0 %v1224
    %v1226 = vand.u32 %v603, 4294901760
    %v1227 = vsub.f32 %v603, %v1226
    %v1228 = vand.u32 %v1227, 4294901760
    %1229 = vmatpush.xpose.msra.mxu0 %v1228
    %v1230 = vand.u32 %v602, 4294901760
    %v1231 = vsub.f32 %v602, %v1230
    %v1232 = vand.u32 %v1231, 4294901760
    %1233 = vmatpush.xpose.msra.mxu0 %v1232
    %v1234 = vand.u32 %v601, 4294901760
    %v1235 = vsub.f32 %v601, %v1234
    %v1236 = vand.u32 %v1235, 4294901760
    %1237 = vmatpush.xpose.msra.mxu0 %v1236
    %v1238 = vand.u32 %v600, 4294901760
    %v1239 = vsub.f32 %v600, %v1238
    %v1240 = vand.u32 %v1239, 4294901760
    %1241 = vmatpush.xpose.msra.mxu0 %v1240
    %v1242 = vand.u32 %v599, 4294901760
    %v1243 = vsub.f32 %v599, %v1242
    %v1244 = vand.u32 %v1243, 4294901760
    %1245 = vmatpush.xpose.msra.mxu0 %v1244
    %v1246 = vand.u32 %v598, 4294901760
    %v1247 = vsub.f32 %v598, %v1246
    %v1248 = vand.u32 %v1247, 4294901760
    %1249 = vmatpush.xpose.msra.mxu0 %v1248
    %v1250 = vand.u32 %v597, 4294901760
    %v1251 = vsub.f32 %v597, %v1250
    %v1252 = vand.u32 %v1251, 4294901760
    %1253 = vmatpush.xpose.msra.mxu0 %v1252
    %v1254 = vand.u32 %v613, 4294901760
    %1255 = vmatmul.f32.gmra.mxu0 %v1254
    %v1256 = vpop.f32.mrf.mxu0
    %v1257 = vadd.f32 %v1188, %v1256
    %1258 = vdwg.mxu0
    %v1259 = vand.u32 %v612, 4294901760
    %1260 = vmatpush.xpose.msra.mxu0 %v1259
    %v1261 = vand.u32 %v611, 4294901760
    %1262 = vmatpush.xpose.msra.mxu0 %v1261
    %v1263 = vand.u32 %v610, 4294901760
    %1264 = vmatpush.xpose.msra.mxu0 %v1263
    %v1265 = vand.u32 %v609, 4294901760
    %1266 = vmatpush.xpose.msra.mxu0 %v1265
    %v1267 = vand.u32 %v608, 4294901760
    %1268 = vmatpush.xpose.msra.mxu0 %v1267
    %v1269 = vand.u32 %v607, 4294901760
    %1270 = vmatpush.xpose.msra.mxu0 %v1269
    %v1271 = vand.u32 %v606, 4294901760
    %1272 = vmatpush.xpose.msra.mxu0 %v1271
    %v1273 = vand.u32 %v605, 4294901760
    %1274 = vmatpush.xpose.msra.mxu0 %v1273
    %v1275 = vand.u32 %v604, 4294901760
    %1276 = vmatpush.xpose.msra.mxu0 %v1275
    %v1277 = vand.u32 %v603, 4294901760
    %1278 = vmatpush.xpose.msra.mxu0 %v1277
    %v1279 = vand.u32 %v602, 4294901760
    %1280 = vmatpush.xpose.msra.mxu0 %v1279
    %v1281 = vand.u32 %v601, 4294901760
    %1282 = vmatpush.xpose.msra.mxu0 %v1281
    %v1283 = vand.u32 %v600, 4294901760
    %1284 = vmatpush.xpose.msra.mxu0 %v1283
    %v1285 = vand.u32 %v599, 4294901760
    %1286 = vmatpush.xpose.msra.mxu0 %v1285
    %v1287 = vand.u32 %v598, 4294901760
    %1288 = vmatpush.xpose.msra.mxu0 %v1287
    %v1289 = vand.u32 %v597, 4294901760
    %1290 = vmatpush.xpose.msra.mxu0 %v1289
    %v1291 = vand.u32 %v613, 4294901760
    %1292 = vmatmul.f32.gmra.mxu0 %v1291
    %v1293 = vpop.f32.mrf.mxu0
    %v1294 = vadd.f32 %v1257, %v1293
    %1295 = vdwg.mxu0
    %1296 = vst [vmem:[#allocation6] sm:$0xff] %v953
    %1297 = vst [vmem:[#allocation6 + $0x8] sm:$0xff] %v1294
    %s1298 = sadd.s32 0, 0
    %s1299 = smul.u32 %s1298, 256
    %v1300 = vlaneseq
    %v1301 = vand.u32 %v1300, 127
    %v1302 = vadd.s32 %v1301, 128
    %v1303 = vld [vmem:[%s2] sm:$0xff]
    %v1304 = vstv %s1299
    %v1305 = vsub.s32 %v1303, %v1304
    %1306 = vset.pattern.permute.xlu0 0
    %1307 = vperm.xlu0 %1306, %v1305
    %v1308 = vpop.permute.xlu0 %1307
    %vm1309 = vcmp.eq.s32.totalorder %v1301, %v1308
    %vm1310 = vcmp.eq.s32.totalorder %v1302, %v1308
    %v1311 = vmul.f32 %v953, 30.0
    %v1312 = vmul.f32 %v1294, 30.0
    %v1313 = vsel %vm1309, 1, 0
    %v1314 = vsel %vm1310, 1, 0
    %v1315 = vcvt.s32.f32 %v1313
    %v1316 = vcvt.s32.f32 %v1314
    %v1317 = vmul.f32 %v1315, 12.0
    %v1318 = vmul.f32 %v1316, 12.0
    %v1319 = vsub.f32 %v1311, %v1317
    %v1320 = vsub.f32 %v1312, %v1318
    %v1321 = vld [vmem:[%s74] sm:$0xff]
    %v1322 = vsel %vm1309, %v1319, 0.0
    %v1323 = vsel %vm1310, %v1320, 0.0
    %v1324 = vadd.f32 %v1322, %v1323
    %1325 = vadd.xlane.f32.xlu0 %v1324
    %v1326 = vpop.xlane.xlu0 %1325
    %v1327 = vadd.f32 %v1321, %v1326
    %vm1328 = vcmask 7168
    %1329 = vst.msk [vmem:[%s74] sm:$0xff] %vm1328, %v1327
    %v1330 = vmax.f32 %v1319, %v1320
    %1331 = vmax.xlane.f32.xlu0 %v1330
    %v1332 = vpop.xlane.xlu0 %1331
    %v1333 = vld [vmem:[%s62] sm:$0xff]
    %v1334 = vmax.f32 %v1333, %v1332
    %v1335 = vld [vmem:[%s68] sm:$0xff]
    %v1336 = vsub.f32 %v1333, %v1334
    %v1337 = vmul.f32 %v1336, 1.442695
    %v1338 = vpow.pop %v1337
    %v1339 = vmul.f32 %v1335, %v1338
    %1341 = vset.pattern.permute.xlu0 0
    %1342 = vperm.xlu0 %1341, %v1334
    %v1343 = vpop.permute.xlu0 %1342
    %v1345 = vsub.f32 %v1319, %v1343
    %v1346 = vsub.f32 %v1320, %v1343
    %v1347 = vmul.f32 %v1345, 1.442695
    %v1348 = vpow.pop %v1347
    %v1349 = vmul.f32 %v1346, 1.442695
    %v1350 = vpow.pop %v1349
    %v1351 = vadd.f32 %v1348, %v1350
    %1352 = vadd.xlane.f32.xlu0 %v1351
    %v1353 = vpop.xlane.xlu0 %1352
    %v1354 = vadd.f32 %v1339, %v1353
    %1355 = vst.msk [vmem:[%s68] sm:$0xff] %vm1328, %v1354
    %1356 = vst.msk [vmem:[%s62] sm:$0xff] %vm1328, %v1334
    %s1357 = sadd.s32 0, 0
    %p1358 = scmp.lt.s32.totalorder %s1357, 0
    %s1359 = scalar_select %p1358, %s1357, 0
    %s1360 = smul.addr %s1359, 8
    %s1361 = scalar_lea.vmem %s4, %s1360
    %s1362 = sadd.s32 0, 0
    %p1363 = scmp.lt.s32.totalorder %s1362, 0
    %s1364 = scalar_select %p1363, %s1362, 0
    %s1365 = smul.addr %s1364, 8
    %s1366 = scalar_lea.vmem %s5, %s1365
    %s1367 = sadd.s32 0, 0
    %p1368 = scmp.lt.s32.totalorder %s1367, 0
    %s1369 = scalar_select %p1368, %s1367, 0
    %s1370 = smul.addr %s1369, 8
    %s1371 = scalar_lea.vmem %s6, %s1370
    // Predicated region
    $region22: #{tpu_custom_call.1} parent=1 // pred_check
      _
    $region23: #{tpu_custom_call.1} parent=1 // pred_check_branch
      %1373 = sbr.rel (0) target = $region25
    $region24: #{tpu_custom_call.1} parent=1 // pred_region
      %s1374 = sadd.s32 0, 0
      %s1375 = smul.u32 2, %s1374
      %1377 = vsyncadd [#allocation5], 0
      %s1378 = smul.addr %s1375, 8
      %s1379 = scalar_lea.hbm %s3, %s1378
      %s1381 = sshll.u32 [#allocation6], 4
      %s1382 = int_to_ptr.vmem [resolvable:$true] %s1381
      %s1383 = sshll.u32 %s1379, 4
      %s1384 = int_to_ptr.hbm [resolvable:$true] %s1383
      %1386 = dma.vmem_to_hbm [thread:$0]  %s1382, 256, %s1384, [#allocation5]
    $region25: #{tpu_custom_call.1} parent=1 // pred_fallthru
      _
    // Predicated region
    $region26: #{tpu_custom_call.1} parent=1 // pred_check
      _
    $region27: #{tpu_custom_call.1} parent=1 // pred_check_branch
      %1388 = sbr.rel (0) target = $region29
    $region28: #{tpu_custom_call.1} parent=1 // pred_region
      %s1389 = sadd.s32 0, 0
    $region29: #{tpu_custom_call.1} parent=1 // pred_fallthru
      _
    // Predicated region
    $region30: #{tpu_custom_call.1} parent=1 // pred_check
      _
    $region31: #{tpu_custom_call.1} parent=1 // pred_check_branch
      %1391 = sbr.rel (0) target = $region33
    $region32: #{tpu_custom_call.1} parent=1 // pred_region
      %s1392 = sadd.s32 0, 0
    $region33: #{tpu_custom_call.1} parent=1 // pred_fallthru
      _
    // Predicated region
    $region34: #{tpu_custom_call.1} parent=1 // pred_check
      _
    $region35: #{tpu_custom_call.1} parent=1 // pred_check_branch
      %1394 = sbr.rel (0) target = $region37
    $region36: #{tpu_custom_call.1} parent=1 // pred_region
      %s1395 = sadd.s32 0, 0
    $region37: #{tpu_custom_call.1} parent=1 // pred_fallthru
      _
    // Predicated region
    $region38: #{tpu_custom_call.1} parent=1 // pred_check
      _
    $region39: #{tpu_custom_call.1} parent=1 // pred_check_branch
      %1397 = sbr.rel (0) target = $region41
    $region40: #{tpu_custom_call.1} parent=1 // pred_region
      %1399 = dma.done [#allocation5], 256
    $region41: #{tpu_custom_call.1} parent=1 // pred_fallthru
      _
    // Predicated region
    $region42: #{tpu_custom_call.1} parent=1 // pred_check
      _
    $region43: #{tpu_custom_call.1} parent=1 // pred_check_branch
      %1401 = sbr.rel (0) target = $region45
    $region44: #{tpu_custom_call.1} parent=1 // pred_region
      %s1402 = sadd.s32 0, 0
      %p1403 = scmp.lt.s32.totalorder %s1402, 0
      %s1404 = scalar_select %p1403, %s1402, 0
      %s1405 = smul.addr %s1404, 8
      %s1406 = scalar_lea.vmem %s4, %s1405
    $region45: #{tpu_custom_call.1} parent=1 // pred_fallthru
      _
    // Predicated region
    $region46: #{tpu_custom_call.1} parent=1 // pred_check
      _
    $region47: #{tpu_custom_call.1} parent=1 // pred_check_branch
      %1408 = sbr.rel (0) target = $region49
    $region48: #{tpu_custom_call.1} parent=1 // pred_region
      %s1409 = sadd.s32 0, 0
      %p1410 = scmp.lt.s32.totalorder %s1409, 0
      %s1411 = scalar_select %p1410, %s1409, 0
      %s1412 = smul.addr %s1411, 8
      %s1413 = scalar_lea.vmem %s5, %s1412
    $region49: #{tpu_custom_call.1} parent=1 // pred_fallthru
      _
    // Predicated region
    $region50: #{tpu_custom_call.1} parent=1 // pred_check
      _
    $region51: #{tpu_custom_call.1} parent=1 // pred_check_branch
      %1415 = sbr.rel (0) target = $region53
    $region52: #{tpu_custom_call.1} parent=1 // pred_region
      %s1416 = sadd.s32 0, 0
      %p1417 = scmp.lt.s32.totalorder %s1416, 0
      %s1418 = scalar_select %p1417, %s1416, 0
      %s1419 = smul.addr %s1418, 8
      %s1420 = scalar_lea.vmem %s6, %s1419
    $region53: #{tpu_custom_call.1} parent=1 // pred_fallthru
      _
    %1421 = vsyncpa [#allocation4], 1
    %1422 = vsyncpa [#allocation5], 1

</llo_original>
